<compile_context>
chip_gen: v5e
topology: v5e:2x2
jax: 0.10.0
libtpu: 0.0.40
codegen_flags: <defaults>
</compile_context>

<pallas_src>
import jax
import jax.numpy as jnp
from jax.experimental import pallas as pl
from jax.experimental.pallas import tpu as pltpu


def _cdiv(a: int, b: int) -> int:
    return (a + b - 1) // b


def _round_up(a: int, m: int) -> int:
    return ((a + m - 1) // m) * m


def _regression_kernel(params_ref, x_ref, e0_ref, e1_ref, o_ref):
    # params_ref: (4,) f32 in SMEM -> [w0, w1, bias, factor]
    # x_ref:      (R, 256) f32 in VMEM, lanes interleaved [x0, x1, x0, x1, ...]
    #             lane l of row g holds component (l % 2) of x-row g*128 + l//2
    # e0_ref/e1_ref: (256, 128) f32 0/1 selection matrices (even / odd lanes)
    # o_ref:      (R, 128) f32 in VMEM, o[g, c] = y for x-row g*128 + c
    w0 = params_ref[0]
    w1 = params_ref[1]
    b = params_ref[2]
    f = params_ref[3]

    t = x_ref[...]  # (R, 256)

    # De-interleave on the MXU (idle otherwise). Selection by exact 0/1 weights
    # under HIGHEST precision is bit-exact for f32 inputs.
    x0 = jnp.dot(t, e0_ref[...], preferred_element_type=jnp.float32,
                 precision=jax.lax.Precision.HIGHEST)  # (R, 128)
    x1 = jnp.dot(t, e1_ref[...], preferred_element_type=jnp.float32,
                 precision=jax.lax.Precision.HIGHEST)  # (R, 128)

    # Linear (explicit 2-term VPU form) + hard-coded x0*x1 interaction term.
    o_ref[...] = (w0 * x0 + w1 * x1 + b + f * (x0 * x1)).astype(o_ref.dtype)


def _pick_block_rows(n_blocks: int, block_rows: int) -> int:
    """Rows of 128-element groups per grid step (sublane dim of the tiles)."""
    block_rows = max(8, _round_up(block_rows, 8))
    if n_blocks <= block_rows:
        if n_blocks >= 16:
            # Split into >= 2 grid steps so v7x megacore can use both cores.
            return _round_up(_cdiv(n_blocks, 2), 8)
        return n_blocks  # single full-extent block (legal for any size)
    return block_rows


def regression_forward(x, weight, bias, factor, *, block_rows=2048):
    """x: (N, 2) f32; weight: (1, 2) f32; bias: () f32; factor: () f32 -> (N, 1) f32."""
    n, p_dim = x.shape
    assert p_dim == 2, "RegressionModel interaction term assumes p == 2"
    x = jnp.asarray(x, jnp.float32)

    # Pack all scalars into one tiny SMEM array: [w0, w1, bias, factor].
    params = jnp.concatenate(
        [
            jnp.asarray(weight, jnp.float32).reshape(-1),
            jnp.asarray(bias, jnp.float32).reshape(1),
            jnp.asarray(factor, jnp.float32).reshape(1),
        ]
    ).astype(jnp.float32)  # (4,)

    n_blocks = _cdiv(n, 128)
    n_rows_padded = n_blocks * 128
    if n_rows_padded != n:
        # Ragged N only: one fused pad pass appending <= 127 zero rows.
        x = jnp.pad(x, ((0, n_rows_padded - n), (0, 0)))

    # Free row-major reinterpretation: (N, 2) -> (N/128, 256), no data movement.
    xv = x.reshape(n_blocks, 256)

    # 0/1 selection matrices: columns pick the even (x0) / odd (x1) lanes.
    rows = jnp.arange(256, dtype=jnp.int32)[:, None]
    cols = jnp.arange(128, dtype=jnp.int32)[None, :]
    e0 = (rows == 2 * cols).astype(jnp.float32)      # (256, 128)
    e1 = (rows == 2 * cols + 1).astype(jnp.float32)  # (256, 128)

    r = _pick_block_rows(n_blocks, block_rows)
    grid = (_cdiv(n_blocks, r),)

    block_in_bytes = r * 256 * 4
    block_out_bytes = r * 128 * 4
    sel_bytes = 2 * 256 * 128 * 4
    # Double-buffered windows + selectors + generous headroom for matmul
    # temporaries; capped at 32 MiB (safe on v5e/v6e/v7x).
    vmem_limit = min(
        32 << 20,
        2 * (block_in_bytes + block_out_bytes) + 2 * sel_bytes + (16 << 20),
    )

    out = pl.pallas_call(
        _regression_kernel,
        out_shape=jax.ShapeDtypeStruct((n_blocks, 128), jnp.float32),
        grid=grid,
        in_specs=[
            pl.BlockSpec(memory_space=pltpu.MemorySpace.SMEM),  # params (whole array)
            pl.BlockSpec((r, 256), lambda i: (i, 0)),           # x, dense tiles
            pl.BlockSpec((256, 128), lambda i: (0, 0)),         # e0 (fetched once)
            pl.BlockSpec((256, 128), lambda i: (0, 0)),         # e1 (fetched once)
        ],
        out_specs=pl.BlockSpec((r, 128), lambda i: (i, 0)),
        compiler_params=pltpu.CompilerParams(
            dimension_semantics=("parallel",),
            vmem_limit_bytes=int(vmem_limit),
        ),
        cost_estimate=pl.CostEstimate(
            flops=8 * n_rows_padded,
            transcendentals=0,
            bytes_accessed=12 * n_rows_padded + sel_bytes,
        ),
    )(params, xv, e0, e1)

    y = out.reshape(-1)  # free reshape: values are already in row order
    if n_rows_padded != n:
        y = y[:n]  # only the ragged case pays a tail-slice copy
    return y.reshape(n, 1)


def _reference(x, weight, bias, factor):
    # Pure element-wise f32 reference (avoids any matmul-precision ambiguity).
    w = jnp.asarray(weight, jnp.float32).reshape(-1)
    x0 = x[:, 0:1]
    x1 = x[:, 1:2]
    return w[0] * x0 + w[1] * x1 + bias + factor * x0 * x1


if __name__ == "__main__":
    p = 2

    key = jax.random.PRNGKey(0)
    kx, kw, kb, kx2, kx3 = jax.random.split(key, 5)

    # Deterministic synthetic parameters (shapes match nn.Linear(p, 1) + scalar factor).
    weight = jax.random.normal(kw, (1, p), dtype=jnp.float32) * 0.5
    bias = jax.random.normal(kb, (), dtype=jnp.float32) * 0.1
    factor = jnp.float32(1.0)  # matches torch.tensor(1.0) init

    # 1) Tiny ragged batch: single grid step, padded-row path.
    N = 8
    x = jax.random.normal(kx, (N, p), dtype=jnp.float32)
    y = jax.block_until_ready(regression_forward(x, weight, bias, factor))
    ref = _reference(x, weight, bias, factor)
    assert y.shape == (N, 1)
    assert jnp.allclose(y, ref, atol=1e-5, rtol=1e-5), (y, ref)

    # 2) 128-aligned batch: zero-copy fast path (no pad, free reshapes).
    N2 = 256
    x2 = jax.random.normal(kx2, (N2, p), dtype=jnp.float32)
    y2 = jax.block_until_ready(regression_forward(x2, weight, bias, factor))
    ref2 = _reference(x2, weight, bias, factor)
    assert y2.shape == (N2, 1)
    assert jnp.allclose(y2, ref2, atol=1e-5, rtol=1e-5), (y2, ref2)

    # 3) Ragged batch forced through a multi-step grid (block_rows=8 -> 1024
    #    rows/step; N=2500 -> 20 row-groups -> 3 grid steps, last block masked).
    N3 = 2500
    x3 = jax.random.normal(kx3, (N3, p), dtype=jnp.float32)
    y3 = jax.block_until_ready(
        regression_forward(x3, weight, bias, factor, block_rows=8)
    )
    ref3 = _reference(x3, weight, bias, factor)
    assert y3.shape == (N3, 1)
    assert jnp.allclose(y3, ref3, atol=1e-5, rtol=1e-5), (y3, ref3)

    print("KERNEL_OK")
</pallas_src>

<mosaic_0001>
module attributes {stable_mosaic.version = 11 : i64} {
  func.func @_regression_kernel(%arg0: i32, %arg1: memref<4xf32, #tpu.memory_space<smem>>, %arg2: memref<1x256xf32, #tpu.memory_space<vmem>>, %arg3: memref<256x128xf32, #tpu.memory_space<vmem>>, %arg4: memref<256x128xf32, #tpu.memory_space<vmem>>, %arg5: memref<1x128xf32, #tpu.memory_space<vmem>>) attributes {dimension_semantics = [#tpu.dimension_semantics<parallel>], iteration_bounds = array<i64: 1>, scalar_prefetch = 0 : i64, scratch_operands = 0 : i64, tpu.core_type = #tpu.core_type<tc>, window_params = [{transform_indices = @transform_0, window_bounds = array<i64: 4>}, {transform_indices = @transform_1, window_bounds = array<i64: 1, 256>}, {pipeline_mode = #tpu.pipeline_mode<synchronous>, transform_indices = @transform_2, window_bounds = array<i64: 256, 128>}, {pipeline_mode = #tpu.pipeline_mode<synchronous>, transform_indices = @transform_3, window_bounds = array<i64: 256, 128>}, {transform_indices = @transform_4, window_bounds = array<i64: 1, 128>}]} {
    %c0 = arith.constant 0 : index
    %0 = memref.load %arg1[%c0] : memref<4xf32, #tpu.memory_space<smem>>
    %c1 = arith.constant 1 : index
    %1 = memref.load %arg1[%c1] : memref<4xf32, #tpu.memory_space<smem>>
    %c2 = arith.constant 2 : index
    %2 = memref.load %arg1[%c2] : memref<4xf32, #tpu.memory_space<smem>>
    %c3 = arith.constant 3 : index
    %3 = memref.load %arg1[%c3] : memref<4xf32, #tpu.memory_space<smem>>
    %c0_0 = arith.constant 0 : index
    %c0_1 = arith.constant 0 : index
    %4 = vector.load %arg2[%c0_0, %c0_1] : memref<1x256xf32, #tpu.memory_space<vmem>>, vector<1x256xf32>
    %c0_2 = arith.constant 0 : index
    %c0_3 = arith.constant 0 : index
    %5 = vector.load %arg3[%c0_2, %c0_3] : memref<256x128xf32, #tpu.memory_space<vmem>>, vector<256x128xf32>
    %cst = arith.constant dense<0.000000e+00> : vector<1x128xf32>
    %6 = tpu.matmul %4, %5, %cst {dimension_numbers = #tpu.dot_dimension_numbers<[1], [0], [0], [1], [0, 0, 1, 1], [], []>, precision = #tpu.contract_precision<fp32>} : vector<1x256xf32>, vector<256x128xf32>, vector<1x128xf32> -> vector<1x128xf32>
    %c0_4 = arith.constant 0 : index
    %c0_5 = arith.constant 0 : index
    %7 = vector.load %arg4[%c0_4, %c0_5] : memref<256x128xf32, #tpu.memory_space<vmem>>, vector<256x128xf32>
    %cst_6 = arith.constant dense<0.000000e+00> : vector<1x128xf32>
    %8 = tpu.matmul %4, %7, %cst_6 {dimension_numbers = #tpu.dot_dimension_numbers<[1], [0], [0], [1], [0, 0, 1, 1], [], []>, precision = #tpu.contract_precision<fp32>} : vector<1x256xf32>, vector<256x128xf32>, vector<1x128xf32> -> vector<1x128xf32>
    %9 = vector.broadcast %0 : f32 to vector<1x128xf32>
    %10 = arith.mulf %9, %6 : vector<1x128xf32>
    %11 = vector.broadcast %1 : f32 to vector<1x128xf32>
    %12 = arith.mulf %11, %8 : vector<1x128xf32>
    %13 = arith.addf %10, %12 : vector<1x128xf32>
    %14 = vector.broadcast %2 : f32 to vector<1x128xf32>
    %15 = arith.addf %13, %14 : vector<1x128xf32>
    %16 = arith.mulf %6, %8 : vector<1x128xf32>
    %17 = vector.broadcast %3 : f32 to vector<1x128xf32>
    %18 = arith.mulf %17, %16 : vector<1x128xf32>
    %19 = arith.addf %15, %18 : vector<1x128xf32>
    %c0_7 = arith.constant 0 : index
    %c0_8 = arith.constant 0 : index
    %20 = vector.load %arg5[%c0_7, %c0_8] : memref<1x128xf32, #tpu.memory_space<vmem>>, vector<1x128xf32>
    tpu.vector_store %arg5[%c0_7, %c0_8], %19 {strides = array<i32>} : memref<1x128xf32, #tpu.memory_space<vmem>>, vector<1x128xf32>,
    return
  }
  func.func @transform_0(%arg0: i32) -> i32 {
    %c0_i32 = arith.constant 0 : i32
    %c0_i32_0 = arith.constant 0 : i32
    return %c0_i32 : i32
  }
  func.func @transform_1(%arg0: i32) -> (i32, i32) {
    %c0_i32 = arith.constant 0 : i32
    %c0_i32_0 = arith.constant 0 : i32
    return %arg0, %c0_i32 : i32, i32
  }
  func.func @transform_2(%arg0: i32) -> (i32, i32) {
    %c0_i32 = arith.constant 0 : i32
    %c0_i32_0 = arith.constant 0 : i32
    %c0_i32_1 = arith.constant 0 : i32
    return %c0_i32, %c0_i32_0 : i32, i32
  }
  func.func @transform_3(%arg0: i32) -> (i32, i32) {
    %c0_i32 = arith.constant 0 : i32
    %c0_i32_0 = arith.constant 0 : i32
    %c0_i32_1 = arith.constant 0 : i32
    return %c0_i32, %c0_i32_0 : i32, i32
  }
  func.func @transform_4(%arg0: i32) -> (i32, i32) {
    %c0_i32 = arith.constant 0 : i32
    %c0_i32_0 = arith.constant 0 : i32
    return %arg0, %c0_i32 : i32, i32
  }
}

</mosaic_0001>

<llo_original>
// kernel: tpu_custom_call.1
$region0: #{tpu_custom_call.1}
  #allocation0 [shape = 'u32[]', space=smem, size = 0x4, offset = 0x4, fixed_abs, tag = 'smem constant byte address 0x4 - core index']
  #allocation1 [shape = 'u32[72,128]{1,0:T(1,128)}', space=vmem, size = 0x9000, scoped, tag = 'internal scratch']
  %s0 = inlined_call_operand.hbm [shape: f32[4], index: 0, kind: input, shape index: {}]
  %s1 = inlined_call_operand.hbm [shape: f32[1,256], index: 1, kind: input, shape index: {}]
  %s2 = inlined_call_operand.hbm [shape: f32[256,128], index: 2, kind: input, shape index: {}]
  %s3 = inlined_call_operand.hbm [shape: f32[256,128], index: 3, kind: input, shape index: {}]
  %s4 = inlined_call_operand.hbm [shape: f32[1,128], index: 4, kind: output, shape index: {}]
  %s5 = sld [smem:[#allocation0]]
  $region42: #{tpu_custom_call.1} parent=0
    _
  %s7 = ssub.s32 1, %s5
  %s8 = scalar_select 0, %s7, %s5
  $region1: #{tpu_custom_call.1} parent=0
    #allocation2 [shape = 'u8[512]{0}', space=smem, size = 0x200, scoped, tag = 'input window, operand 0, single buffered']
    #allocation3 [shape = 's32[1]{0}', space=sflag, size = 0x4, scoped, tag = 'scoped memory for tpu_custom_call.1']
    #allocation4 [shape = 's32[1]{0}', space=sflag, size = 0x4, scoped, tag = 'scoped memory for tpu_custom_call.1']
    #allocation5 [shape = 's32[1]{0}', space=sflag, size = 0x4, scoped, tag = 'scoped memory for tpu_custom_call.1']
    #allocation6 [shape = 'u8[1024]{0}', space=vmem, size = 0x400, scoped, tag = 'input window, operand 1, single buffered']
    #allocation7 [shape = 'u8[131072]{0}', space=vmem, size = 0x20000, scoped, tag = 'input window, operand 2, single buffered']
    #allocation8 [shape = 's32[1]{0}', space=sflag, size = 0x4, scoped, tag = 'scoped memory for tpu_custom_call.1']
    #allocation9 [shape = 'u8[131072]{0}', space=vmem, size = 0x20000, scoped, tag = 'input window, operand 3, single buffered']
    #allocation10 [shape = 'u8[512]{0}', space=vmem, size = 0x400, scoped, tag = 'output window, operand 0, single buffered']
    %9 = vsyncpa [#allocation5], 0
    %10 = vsyncpa [#allocation3], 0
    %11 = vsyncpa [#allocation8], 0
    %12 = vsyncpa [#allocation4], 0
    // Predicated region
    $region2: #{tpu_custom_call.1} parent=1 // pred_check
      _
    $region3: #{tpu_custom_call.1} parent=1 // pred_check_branch
      %14 = sbr.rel (0) target = $region5
    $region4: #{tpu_custom_call.1} parent=1 // pred_region
      %16 = vsyncadd [#allocation5], 0
      %s18 = sshll.u32 %s0, 4
      %s19 = int_to_ptr.hbm [resolvable:$true] %s18
      %21 = dma.hbm_to_smem %s19, 16, [#allocation2], [#allocation5]
    $region5: #{tpu_custom_call.1} parent=1 // pred_fallthru
      _
    // Predicated region
    $region6: #{tpu_custom_call.1} parent=1 // pred_check
      _
    $region7: #{tpu_custom_call.1} parent=1 // pred_check_branch
      %23 = sbr.rel (0) target = $region9
    $region8: #{tpu_custom_call.1} parent=1 // pred_region
      %25 = vsyncadd [#allocation3], 0
      %s27 = sshll.u32 %s1, 4
      %s28 = int_to_ptr.hbm [resolvable:$true] %s27
      %s29 = sshll.u32 [#allocation6], 4
      %s30 = int_to_ptr.vmem [resolvable:$true] %s29
      %32 = dma.hbm_to_vmem [thread:$0]  %s28, 32, %s30, [#allocation3]
    $region9: #{tpu_custom_call.1} parent=1 // pred_fallthru
      _
    // Predicated region
    $region10: #{tpu_custom_call.1} parent=1 // pred_check
      _
    $region11: #{tpu_custom_call.1} parent=1 // pred_check_branch
      %34 = sbr.rel (0) target = $region13
    $region12: #{tpu_custom_call.1} parent=1 // pred_region
      %36 = vsyncadd [#allocation8], 0
      %s37 = sshll.u32 %s2, 4
      %s38 = int_to_ptr.hbm [resolvable:$true] %s37
      %s39 = sshll.u32 [#allocation7], 4
      %s40 = int_to_ptr.vmem [resolvable:$true] %s39
      %45 = dma.hbm_to_vmem [thread:$0]  %s38, 4096, %s40, [#allocation8], 128, 128, 8
    $region13: #{tpu_custom_call.1} parent=1 // pred_fallthru
      _
    // Predicated region
    $region14: #{tpu_custom_call.1} parent=1 // pred_check
      _
    $region15: #{tpu_custom_call.1} parent=1 // pred_check_branch
      %47 = sbr.rel (0) target = $region17
    $region16: #{tpu_custom_call.1} parent=1 // pred_region
      %49 = vsyncadd [#allocation8], 0
      %s50 = sshll.u32 %s3, 4
      %s51 = int_to_ptr.hbm [resolvable:$true] %s50
      %s52 = sshll.u32 [#allocation9], 4
      %s53 = int_to_ptr.vmem [resolvable:$true] %s52
      %58 = dma.hbm_to_vmem [thread:$0]  %s51, 4096, %s53, [#allocation8], 128, 128, 8
    $region17: #{tpu_custom_call.1} parent=1 // pred_fallthru
      _
    // Predicated region
    $region18: #{tpu_custom_call.1} parent=1 // pred_check
      _
    $region19: #{tpu_custom_call.1} parent=1 // pred_check_branch
      %60 = sbr.rel (0) target = $region21
    $region20: #{tpu_custom_call.1} parent=1 // pred_region
      %62 = dma.done [#allocation5], 16
    $region21: #{tpu_custom_call.1} parent=1 // pred_fallthru
      _
    // Predicated region
    $region22: #{tpu_custom_call.1} parent=1 // pred_check
      _
    $region23: #{tpu_custom_call.1} parent=1 // pred_check_branch
      %64 = sbr.rel (0) target = $region25
    $region24: #{tpu_custom_call.1} parent=1 // pred_region
      %66 = dma.done [#allocation3], 32
    $region25: #{tpu_custom_call.1} parent=1 // pred_fallthru
      _
    // Predicated region
    $region26: #{tpu_custom_call.1} parent=1 // pred_check
      _
    $region27: #{tpu_custom_call.1} parent=1 // pred_check_branch
      %68 = sbr.rel (0) target = $region29
    $region28: #{tpu_custom_call.1} parent=1 // pred_region
      %70 = dma.done [#allocation8], 4096
    $region29: #{tpu_custom_call.1} parent=1 // pred_fallthru
      _
    // Predicated region
    $region30: #{tpu_custom_call.1} parent=1 // pred_check
      _
    $region31: #{tpu_custom_call.1} parent=1 // pred_check_branch
      %72 = sbr.rel (0) target = $region33
    $region32: #{tpu_custom_call.1} parent=1 // pred_region
      %74 = dma.done [#allocation8], 4096
    $region33: #{tpu_custom_call.1} parent=1 // pred_fallthru
      _
    %75 = sfence
    %s76 = sld [smem:[#allocation2]]
    %s77 = sld [smem:[#allocation2 + $0x1]]
    %s78 = sld [smem:[#allocation2 + $0x2]]
    %s79 = sld [smem:[#allocation2 + $0x3]]
    %v80 = vld [vmem:[#allocation6] sm:$0x3]
    %v81 = vld [vmem:[#allocation7] sm:$0xff]
    %v82 = vld [vmem:[#allocation7 + $0x8] sm:$0xff]
    %v83 = vld [vmem:[#allocation7 + $0x10] sm:$0xff]
    %v84 = vld [vmem:[#allocation7 + $0x18] sm:$0xff]
    %v85 = vld [vmem:[#allocation7 + $0x20] sm:$0xff]
    %v86 = vld [vmem:[#allocation7 + $0x28] sm:$0xff]
    %v87 = vld [vmem:[#allocation7 + $0x30] sm:$0xff]
    %v88 = vld [vmem:[#allocation7 + $0x38] sm:$0xff]
    %v89 = vld [vmem:[#allocation7 + $0x40] sm:$0xff]
    %v90 = vld [vmem:[#allocation7 + $0x48] sm:$0xff]
    %v91 = vld [vmem:[#allocation7 + $0x50] sm:$0xff]
    %v92 = vld [vmem:[#allocation7 + $0x58] sm:$0xff]
    %v93 = vld [vmem:[#allocation7 + $0x60] sm:$0xff]
    %v94 = vld [vmem:[#allocation7 + $0x68] sm:$0xff]
    %v95 = vld [vmem:[#allocation7 + $0x70] sm:$0xff]
    %v96 = vld [vmem:[#allocation7 + $0x78] sm:$0xff]
    %v97 = vld [vmem:[#allocation7 + $0x80] sm:$0xff]
    %v98 = vld [vmem:[#allocation7 + $0x88] sm:$0xff]
    %v99 = vld [vmem:[#allocation7 + $0x90] sm:$0xff]
    %v100 = vld [vmem:[#allocation7 + $0x98] sm:$0xff]
    %v101 = vld [vmem:[#allocation7 + $0xa0] sm:$0xff]
    %v102 = vld [vmem:[#allocation7 + $0xa8] sm:$0xff]
    %v103 = vld [vmem:[#allocation7 + $0xb0] sm:$0xff]
    %v104 = vld [vmem:[#allocation7 + $0xb8] sm:$0xff]
    %v105 = vld [vmem:[#allocation7 + $0xc0] sm:$0xff]
    %v106 = vld [vmem:[#allocation7 + $0xc8] sm:$0xff]
    %v107 = vld [vmem:[#allocation7 + $0xd0] sm:$0xff]
    %v108 = vld [vmem:[#allocation7 + $0xd8] sm:$0xff]
    %v109 = vld [vmem:[#allocation7 + $0xe0] sm:$0xff]
    %v110 = vld [vmem:[#allocation7 + $0xe8] sm:$0xff]
    %v111 = vld [vmem:[#allocation7 + $0xf0] sm:$0xff]
    %v112 = vld [vmem:[#allocation7 + $0xf8] sm:$0xff]
    %v114 = vperm.slane %v80, 0
    %v115 = vperm.slane %v80, 1
    %v118 = vand.u32 %v96, 4294901760
    %119 = vmatpush.msra.mxu0 %v118
    %v120 = vand.u32 %v95, 4294901760
    %121 = vmatpush.msra.mxu0 %v120
    %v122 = vand.u32 %v94, 4294901760
    %123 = vmatpush.msra.mxu0 %v122
    %v124 = vand.u32 %v93, 4294901760
    %125 = vmatpush.msra.mxu0 %v124
    %v126 = vand.u32 %v92, 4294901760
    %127 = vmatpush.msra.mxu0 %v126
    %v128 = vand.u32 %v91, 4294901760
    %129 = vmatpush.msra.mxu0 %v128
    %v130 = vand.u32 %v90, 4294901760
    %131 = vmatpush.msra.mxu0 %v130
    %v132 = vand.u32 %v89, 4294901760
    %133 = vmatpush.msra.mxu0 %v132
    %v134 = vand.u32 %v88, 4294901760
    %135 = vmatpush.msra.mxu0 %v134
    %v136 = vand.u32 %v87, 4294901760
    %137 = vmatpush.msra.mxu0 %v136
    %v138 = vand.u32 %v86, 4294901760
    %139 = vmatpush.msra.mxu0 %v138
    %v140 = vand.u32 %v85, 4294901760
    %141 = vmatpush.msra.mxu0 %v140
    %v142 = vand.u32 %v84, 4294901760
    %143 = vmatpush.msra.mxu0 %v142
    %v144 = vand.u32 %v83, 4294901760
    %145 = vmatpush.msra.mxu0 %v144
    %v146 = vand.u32 %v82, 4294901760
    %147 = vmatpush.msra.mxu0 %v146
    %v148 = vand.u32 %v81, 4294901760
    %149 = vmatpush.msra.mxu0 %v148
    %v150 = vand.u32 %v114, 4294901760
    %v151 = vsub.f32 %v114, %v150
    %v152 = vand.u32 %v151, 4294901760
    %v153 = vsub.f32 %v151, %v152
    %v154 = vand.u32 %v153, 4294901760
    %155 = vmatmul.f32.gmra.mxu0 %v154
    %v156 = vpop.f32.mrf.mxu0
    %v157 = vadd.f32 0.0, %v156
    %158 = vdwg.mxu0
    %v159 = vand.u32 %v96, 4294901760
    %v160 = vsub.f32 %v96, %v159
    %v161 = vand.u32 %v160, 4294901760
    %v162 = vsub.f32 %v160, %v161
    %v163 = vand.u32 %v162, 4294901760
    %164 = vmatpush.msra.mxu0 %v163
    %v165 = vand.u32 %v95, 4294901760
    %v166 = vsub.f32 %v95, %v165
    %v167 = vand.u32 %v166, 4294901760
    %v168 = vsub.f32 %v166, %v167
    %v169 = vand.u32 %v168, 4294901760
    %170 = vmatpush.msra.mxu0 %v169
    %v171 = vand.u32 %v94, 4294901760
    %v172 = vsub.f32 %v94, %v171
    %v173 = vand.u32 %v172, 4294901760
    %v174 = vsub.f32 %v172, %v173
    %v175 = vand.u32 %v174, 4294901760
    %176 = vmatpush.msra.mxu0 %v175
    %v177 = vand.u32 %v93, 4294901760
    %v178 = vsub.f32 %v93, %v177
    %v179 = vand.u32 %v178, 4294901760
    %v180 = vsub.f32 %v178, %v179
    %v181 = vand.u32 %v180, 4294901760
    %182 = vmatpush.msra.mxu0 %v181
    %v183 = vand.u32 %v92, 4294901760
    %v184 = vsub.f32 %v92, %v183
    %v185 = vand.u32 %v184, 4294901760
    %v186 = vsub.f32 %v184, %v185
    %v187 = vand.u32 %v186, 4294901760
    %188 = vmatpush.msra.mxu0 %v187
    %v189 = vand.u32 %v91, 4294901760
    %v190 = vsub.f32 %v91, %v189
    %v191 = vand.u32 %v190, 4294901760
    %v192 = vsub.f32 %v190, %v191
    %v193 = vand.u32 %v192, 4294901760
    %194 = vmatpush.msra.mxu0 %v193
    %v195 = vand.u32 %v90, 4294901760
    %v196 = vsub.f32 %v90, %v195
    %v197 = vand.u32 %v196, 4294901760
    %v198 = vsub.f32 %v196, %v197
    %v199 = vand.u32 %v198, 4294901760
    %200 = vmatpush.msra.mxu0 %v199
    %v201 = vand.u32 %v89, 4294901760
    %v202 = vsub.f32 %v89, %v201
    %v203 = vand.u32 %v202, 4294901760
    %v204 = vsub.f32 %v202, %v203
    %v205 = vand.u32 %v204, 4294901760
    %206 = vmatpush.msra.mxu0 %v205
    %v207 = vand.u32 %v88, 4294901760
    %v208 = vsub.f32 %v88, %v207
    %v209 = vand.u32 %v208, 4294901760
    %v210 = vsub.f32 %v208, %v209
    %v211 = vand.u32 %v210, 4294901760
    %212 = vmatpush.msra.mxu0 %v211
    %v213 = vand.u32 %v87, 4294901760
    %v214 = vsub.f32 %v87, %v213
    %v215 = vand.u32 %v214, 4294901760
    %v216 = vsub.f32 %v214, %v215
    %v217 = vand.u32 %v216, 4294901760
    %218 = vmatpush.msra.mxu0 %v217
    %v219 = vand.u32 %v86, 4294901760
    %v220 = vsub.f32 %v86, %v219
    %v221 = vand.u32 %v220, 4294901760
    %v222 = vsub.f32 %v220, %v221
    %v223 = vand.u32 %v222, 4294901760
    %224 = vmatpush.msra.mxu0 %v223
    %v225 = vand.u32 %v85, 4294901760
    %v226 = vsub.f32 %v85, %v225
    %v227 = vand.u32 %v226, 4294901760
    %v228 = vsub.f32 %v226, %v227
    %v229 = vand.u32 %v228, 4294901760
    %230 = vmatpush.msra.mxu0 %v229
    %v231 = vand.u32 %v84, 4294901760
    %v232 = vsub.f32 %v84, %v231
    %v233 = vand.u32 %v232, 4294901760
    %v234 = vsub.f32 %v232, %v233
    %v235 = vand.u32 %v234, 4294901760
    %236 = vmatpush.msra.mxu0 %v235
    %v237 = vand.u32 %v83, 4294901760
    %v238 = vsub.f32 %v83, %v237
    %v239 = vand.u32 %v238, 4294901760
    %v240 = vsub.f32 %v238, %v239
    %v241 = vand.u32 %v240, 4294901760
    %242 = vmatpush.msra.mxu0 %v241
    %v243 = vand.u32 %v82, 4294901760
    %v244 = vsub.f32 %v82, %v243
    %v245 = vand.u32 %v244, 4294901760
    %v246 = vsub.f32 %v244, %v245
    %v247 = vand.u32 %v246, 4294901760
    %248 = vmatpush.msra.mxu0 %v247
    %v249 = vand.u32 %v81, 4294901760
    %v250 = vsub.f32 %v81, %v249
    %v251 = vand.u32 %v250, 4294901760
    %v252 = vsub.f32 %v250, %v251
    %v253 = vand.u32 %v252, 4294901760
    %254 = vmatpush.msra.mxu0 %v253
    %v255 = vand.u32 %v114, 4294901760
    %256 = vmatmul.f32.gmra.mxu0 %v255
    %v257 = vpop.f32.mrf.mxu0
    %v258 = vadd.f32 %v157, %v257
    %259 = vdwg.mxu0
    %v260 = vand.u32 %v96, 4294901760
    %v261 = vsub.f32 %v96, %v260
    %262 = vmatpush.msra.mxu0 %v261
    %v263 = vand.u32 %v95, 4294901760
    %v264 = vsub.f32 %v95, %v263
    %265 = vmatpush.msra.mxu0 %v264
    %v266 = vand.u32 %v94, 4294901760
    %v267 = vsub.f32 %v94, %v266
    %268 = vmatpush.msra.mxu0 %v267
    %v269 = vand.u32 %v93, 4294901760
    %v270 = vsub.f32 %v93, %v269
    %271 = vmatpush.msra.mxu0 %v270
    %v272 = vand.u32 %v92, 4294901760
    %v273 = vsub.f32 %v92, %v272
    %274 = vmatpush.msra.mxu0 %v273
    %v275 = vand.u32 %v91, 4294901760
    %v276 = vsub.f32 %v91, %v275
    %277 = vmatpush.msra.mxu0 %v276
    %v278 = vand.u32 %v90, 4294901760
    %v279 = vsub.f32 %v90, %v278
    %280 = vmatpush.msra.mxu0 %v279
    %v281 = vand.u32 %v89, 4294901760
    %v282 = vsub.f32 %v89, %v281
    %283 = vmatpush.msra.mxu0 %v282
    %v284 = vand.u32 %v88, 4294901760
    %v285 = vsub.f32 %v88, %v284
    %286 = vmatpush.msra.mxu0 %v285
    %v287 = vand.u32 %v87, 4294901760
    %v288 = vsub.f32 %v87, %v287
    %289 = vmatpush.msra.mxu0 %v288
    %v290 = vand.u32 %v86, 4294901760
    %v291 = vsub.f32 %v86, %v290
    %292 = vmatpush.msra.mxu0 %v291
    %v293 = vand.u32 %v85, 4294901760
    %v294 = vsub.f32 %v85, %v293
    %295 = vmatpush.msra.mxu0 %v294
    %v296 = vand.u32 %v84, 4294901760
    %v297 = vsub.f32 %v84, %v296
    %298 = vmatpush.msra.mxu0 %v297
    %v299 = vand.u32 %v83, 4294901760
    %v300 = vsub.f32 %v83, %v299
    %301 = vmatpush.msra.mxu0 %v300
    %v302 = vand.u32 %v82, 4294901760
    %v303 = vsub.f32 %v82, %v302
    %304 = vmatpush.msra.mxu0 %v303
    %v305 = vand.u32 %v81, 4294901760
    %v306 = vsub.f32 %v81, %v305
    %307 = vmatpush.msra.mxu0 %v306
    %v308 = vand.u32 %v114, 4294901760
    %v309 = vsub.f32 %v114, %v308
    %310 = vmatmul.f32.gmra.mxu0 %v309
    %v311 = vpop.f32.mrf.mxu0
    %v312 = vadd.f32 %v258, %v311
    %313 = vdwg.mxu0
    %v314 = vand.u32 %v96, 4294901760
    %315 = vmatpush.msra.mxu0 %v314
    %v316 = vand.u32 %v95, 4294901760
    %317 = vmatpush.msra.mxu0 %v316
    %v318 = vand.u32 %v94, 4294901760
    %319 = vmatpush.msra.mxu0 %v318
    %v320 = vand.u32 %v93, 4294901760
    %321 = vmatpush.msra.mxu0 %v320
    %v322 = vand.u32 %v92, 4294901760
    %323 = vmatpush.msra.mxu0 %v322
    %v324 = vand.u32 %v91, 4294901760
    %325 = vmatpush.msra.mxu0 %v324
    %v326 = vand.u32 %v90, 4294901760
    %327 = vmatpush.msra.mxu0 %v326
    %v328 = vand.u32 %v89, 4294901760
    %329 = vmatpush.msra.mxu0 %v328
    %v330 = vand.u32 %v88, 4294901760
    %331 = vmatpush.msra.mxu0 %v330
    %v332 = vand.u32 %v87, 4294901760
    %333 = vmatpush.msra.mxu0 %v332
    %v334 = vand.u32 %v86, 4294901760
    %335 = vmatpush.msra.mxu0 %v334
    %v336 = vand.u32 %v85, 4294901760
    %337 = vmatpush.msra.mxu0 %v336
    %v338 = vand.u32 %v84, 4294901760
    %339 = vmatpush.msra.mxu0 %v338
    %v340 = vand.u32 %v83, 4294901760
    %341 = vmatpush.msra.mxu0 %v340
    %v342 = vand.u32 %v82, 4294901760
    %343 = vmatpush.msra.mxu0 %v342
    %v344 = vand.u32 %v81, 4294901760
    %345 = vmatpush.msra.mxu0 %v344
    %v346 = vand.u32 %v114, 4294901760
    %v347 = vsub.f32 %v114, %v346
    %v348 = vand.u32 %v347, 4294901760
    %349 = vmatmul.f32.gmra.mxu0 %v348
    %v350 = vpop.f32.mrf.mxu0
    %v351 = vadd.f32 %v312, %v350
    %352 = vdwg.mxu0
    %v353 = vand.u32 %v96, 4294901760
    %v354 = vsub.f32 %v96, %v353
    %v355 = vand.u32 %v354, 4294901760
    %356 = vmatpush.msra.mxu0 %v355
    %v357 = vand.u32 %v95, 4294901760
    %v358 = vsub.f32 %v95, %v357
    %v359 = vand.u32 %v358, 4294901760
    %360 = vmatpush.msra.mxu0 %v359
    %v361 = vand.u32 %v94, 4294901760
    %v362 = vsub.f32 %v94, %v361
    %v363 = vand.u32 %v362, 4294901760
    %364 = vmatpush.msra.mxu0 %v363
    %v365 = vand.u32 %v93, 4294901760
    %v366 = vsub.f32 %v93, %v365
    %v367 = vand.u32 %v366, 4294901760
    %368 = vmatpush.msra.mxu0 %v367
    %v369 = vand.u32 %v92, 4294901760
    %v370 = vsub.f32 %v92, %v369
    %v371 = vand.u32 %v370, 4294901760
    %372 = vmatpush.msra.mxu0 %v371
    %v373 = vand.u32 %v91, 4294901760
    %v374 = vsub.f32 %v91, %v373
    %v375 = vand.u32 %v374, 4294901760
    %376 = vmatpush.msra.mxu0 %v375
    %v377 = vand.u32 %v90, 4294901760
    %v378 = vsub.f32 %v90, %v377
    %v379 = vand.u32 %v378, 4294901760
    %380 = vmatpush.msra.mxu0 %v379
    %v381 = vand.u32 %v89, 4294901760
    %v382 = vsub.f32 %v89, %v381
    %v383 = vand.u32 %v382, 4294901760
    %384 = vmatpush.msra.mxu0 %v383
    %v385 = vand.u32 %v88, 4294901760
    %v386 = vsub.f32 %v88, %v385
    %v387 = vand.u32 %v386, 4294901760
    %388 = vmatpush.msra.mxu0 %v387
    %v389 = vand.u32 %v87, 4294901760
    %v390 = vsub.f32 %v87, %v389
    %v391 = vand.u32 %v390, 4294901760
    %392 = vmatpush.msra.mxu0 %v391
    %v393 = vand.u32 %v86, 4294901760
    %v394 = vsub.f32 %v86, %v393
    %v395 = vand.u32 %v394, 4294901760
    %396 = vmatpush.msra.mxu0 %v395
    %v397 = vand.u32 %v85, 4294901760
    %v398 = vsub.f32 %v85, %v397
    %v399 = vand.u32 %v398, 4294901760
    %400 = vmatpush.msra.mxu0 %v399
    %v401 = vand.u32 %v84, 4294901760
    %v402 = vsub.f32 %v84, %v401
    %v403 = vand.u32 %v402, 4294901760
    %404 = vmatpush.msra.mxu0 %v403
    %v405 = vand.u32 %v83, 4294901760
    %v406 = vsub.f32 %v83, %v405
    %v407 = vand.u32 %v406, 4294901760
    %408 = vmatpush.msra.mxu0 %v407
    %v409 = vand.u32 %v82, 4294901760
    %v410 = vsub.f32 %v82, %v409
    %v411 = vand.u32 %v410, 4294901760
    %412 = vmatpush.msra.mxu0 %v411
    %v413 = vand.u32 %v81, 4294901760
    %v414 = vsub.f32 %v81, %v413
    %v415 = vand.u32 %v414, 4294901760
    %416 = vmatpush.msra.mxu0 %v415
    %v417 = vand.u32 %v114, 4294901760
    %418 = vmatmul.f32.gmra.mxu0 %v417
    %v419 = vpop.f32.mrf.mxu0
    %v420 = vadd.f32 %v351, %v419
    %421 = vdwg.mxu0
    %v422 = vand.u32 %v96, 4294901760
    %423 = vmatpush.msra.mxu0 %v422
    %v424 = vand.u32 %v95, 4294901760
    %425 = vmatpush.msra.mxu0 %v424
    %v426 = vand.u32 %v94, 4294901760
    %427 = vmatpush.msra.mxu0 %v426
    %v428 = vand.u32 %v93, 4294901760
    %429 = vmatpush.msra.mxu0 %v428
    %v430 = vand.u32 %v92, 4294901760
    %431 = vmatpush.msra.mxu0 %v430
    %v432 = vand.u32 %v91, 4294901760
    %433 = vmatpush.msra.mxu0 %v432
    %v434 = vand.u32 %v90, 4294901760
    %435 = vmatpush.msra.mxu0 %v434
    %v436 = vand.u32 %v89, 4294901760
    %437 = vmatpush.msra.mxu0 %v436
    %v438 = vand.u32 %v88, 4294901760
    %439 = vmatpush.msra.mxu0 %v438
    %v440 = vand.u32 %v87, 4294901760
    %441 = vmatpush.msra.mxu0 %v440
    %v442 = vand.u32 %v86, 4294901760
    %443 = vmatpush.msra.mxu0 %v442
    %v444 = vand.u32 %v85, 4294901760
    %445 = vmatpush.msra.mxu0 %v444
    %v446 = vand.u32 %v84, 4294901760
    %447 = vmatpush.msra.mxu0 %v446
    %v448 = vand.u32 %v83, 4294901760
    %449 = vmatpush.msra.mxu0 %v448
    %v450 = vand.u32 %v82, 4294901760
    %451 = vmatpush.msra.mxu0 %v450
    %v452 = vand.u32 %v81, 4294901760
    %453 = vmatpush.msra.mxu0 %v452
    %v454 = vand.u32 %v114, 4294901760
    %455 = vmatmul.f32.gmra.mxu0 %v454
    %v456 = vpop.f32.mrf.mxu0
    %v457 = vadd.f32 %v420, %v456
    %458 = vdwg.mxu0
    %v459 = vand.u32 %v112, 4294901760
    %460 = vmatpush.msra.mxu0 %v459
    %v461 = vand.u32 %v111, 4294901760
    %462 = vmatpush.msra.mxu0 %v461
    %v463 = vand.u32 %v110, 4294901760
    %464 = vmatpush.msra.mxu0 %v463
    %v465 = vand.u32 %v109, 4294901760
    %466 = vmatpush.msra.mxu0 %v465
    %v467 = vand.u32 %v108, 4294901760
    %468 = vmatpush.msra.mxu0 %v467
    %v469 = vand.u32 %v107, 4294901760
    %470 = vmatpush.msra.mxu0 %v469
    %v471 = vand.u32 %v106, 4294901760
    %472 = vmatpush.msra.mxu0 %v471
    %v473 = vand.u32 %v105, 4294901760
    %474 = vmatpush.msra.mxu0 %v473
    %v475 = vand.u32 %v104, 4294901760
    %476 = vmatpush.msra.mxu0 %v475
    %v477 = vand.u32 %v103, 4294901760
    %478 = vmatpush.msra.mxu0 %v477
    %v479 = vand.u32 %v102, 4294901760
    %480 = vmatpush.msra.mxu0 %v479
    %v481 = vand.u32 %v101, 4294901760
    %482 = vmatpush.msra.mxu0 %v481
    %v483 = vand.u32 %v100, 4294901760
    %484 = vmatpush.msra.mxu0 %v483
    %v485 = vand.u32 %v99, 4294901760
    %486 = vmatpush.msra.mxu0 %v485
    %v487 = vand.u32 %v98, 4294901760
    %488 = vmatpush.msra.mxu0 %v487
    %v489 = vand.u32 %v97, 4294901760
    %490 = vmatpush.msra.mxu0 %v489
    %v491 = vand.u32 %v115, 4294901760
    %v492 = vsub.f32 %v115, %v491
    %v493 = vand.u32 %v492, 4294901760
    %v494 = vsub.f32 %v492, %v493
    %v495 = vand.u32 %v494, 4294901760
    %496 = vmatmul.f32.gmra.mxu0 %v495
    %v497 = vpop.f32.mrf.mxu0
    %v498 = vadd.f32 %v457, %v497
    %499 = vdwg.mxu0
    %v500 = vand.u32 %v112, 4294901760
    %v501 = vsub.f32 %v112, %v500
    %v502 = vand.u32 %v501, 4294901760
    %v503 = vsub.f32 %v501, %v502
    %v504 = vand.u32 %v503, 4294901760
    %505 = vmatpush.msra.mxu0 %v504
    %v506 = vand.u32 %v111, 4294901760
    %v507 = vsub.f32 %v111, %v506
    %v508 = vand.u32 %v507, 4294901760
    %v509 = vsub.f32 %v507, %v508
    %v510 = vand.u32 %v509, 4294901760
    %511 = vmatpush.msra.mxu0 %v510
    %v512 = vand.u32 %v110, 4294901760
    %v513 = vsub.f32 %v110, %v512
    %v514 = vand.u32 %v513, 4294901760
    %v515 = vsub.f32 %v513, %v514
    %v516 = vand.u32 %v515, 4294901760
    %517 = vmatpush.msra.mxu0 %v516
    %v518 = vand.u32 %v109, 4294901760
    %v519 = vsub.f32 %v109, %v518
    %v520 = vand.u32 %v519, 4294901760
    %v521 = vsub.f32 %v519, %v520
    %v522 = vand.u32 %v521, 4294901760
    %523 = vmatpush.msra.mxu0 %v522
    %v524 = vand.u32 %v108, 4294901760
    %v525 = vsub.f32 %v108, %v524
    %v526 = vand.u32 %v525, 4294901760
    %v527 = vsub.f32 %v525, %v526
    %v528 = vand.u32 %v527, 4294901760
    %529 = vmatpush.msra.mxu0 %v528
    %v530 = vand.u32 %v107, 4294901760
    %v531 = vsub.f32 %v107, %v530
    %v532 = vand.u32 %v531, 4294901760
    %v533 = vsub.f32 %v531, %v532
    %v534 = vand.u32 %v533, 4294901760
    %535 = vmatpush.msra.mxu0 %v534
    %v536 = vand.u32 %v106, 4294901760
    %v537 = vsub.f32 %v106, %v536
    %v538 = vand.u32 %v537, 4294901760
    %v539 = vsub.f32 %v537, %v538
    %v540 = vand.u32 %v539, 4294901760
    %541 = vmatpush.msra.mxu0 %v540
    %v542 = vand.u32 %v105, 4294901760
    %v543 = vsub.f32 %v105, %v542
    %v544 = vand.u32 %v543, 4294901760
    %v545 = vsub.f32 %v543, %v544
    %v546 = vand.u32 %v545, 4294901760
    %547 = vmatpush.msra.mxu0 %v546
    %v548 = vand.u32 %v104, 4294901760
    %v549 = vsub.f32 %v104, %v548
    %v550 = vand.u32 %v549, 4294901760
    %v551 = vsub.f32 %v549, %v550
    %v552 = vand.u32 %v551, 4294901760
    %553 = vmatpush.msra.mxu0 %v552
    %v554 = vand.u32 %v103, 4294901760
    %v555 = vsub.f32 %v103, %v554
    %v556 = vand.u32 %v555, 4294901760
    %v557 = vsub.f32 %v555, %v556
    %v558 = vand.u32 %v557, 4294901760
    %559 = vmatpush.msra.mxu0 %v558
    %v560 = vand.u32 %v102, 4294901760
    %v561 = vsub.f32 %v102, %v560
    %v562 = vand.u32 %v561, 4294901760
    %v563 = vsub.f32 %v561, %v562
    %v564 = vand.u32 %v563, 4294901760
    %565 = vmatpush.msra.mxu0 %v564
    %v566 = vand.u32 %v101, 4294901760
    %v567 = vsub.f32 %v101, %v566
    %v568 = vand.u32 %v567, 4294901760
    %v569 = vsub.f32 %v567, %v568
    %v570 = vand.u32 %v569, 4294901760
    %571 = vmatpush.msra.mxu0 %v570
    %v572 = vand.u32 %v100, 4294901760
    %v573 = vsub.f32 %v100, %v572
    %v574 = vand.u32 %v573, 4294901760
    %v575 = vsub.f32 %v573, %v574
    %v576 = vand.u32 %v575, 4294901760
    %577 = vmatpush.msra.mxu0 %v576
    %v578 = vand.u32 %v99, 4294901760
    %v579 = vsub.f32 %v99, %v578
    %v580 = vand.u32 %v579, 4294901760
    %v581 = vsub.f32 %v579, %v580
    %v582 = vand.u32 %v581, 4294901760
    %583 = vmatpush.msra.mxu0 %v582
    %v584 = vand.u32 %v98, 4294901760
    %v585 = vsub.f32 %v98, %v584
    %v586 = vand.u32 %v585, 4294901760
    %v587 = vsub.f32 %v585, %v586
    %v588 = vand.u32 %v587, 4294901760
    %589 = vmatpush.msra.mxu0 %v588
    %v590 = vand.u32 %v97, 4294901760
    %v591 = vsub.f32 %v97, %v590
    %v592 = vand.u32 %v591, 4294901760
    %v593 = vsub.f32 %v591, %v592
    %v594 = vand.u32 %v593, 4294901760
    %595 = vmatpush.msra.mxu0 %v594
    %v596 = vand.u32 %v115, 4294901760
    %597 = vmatmul.f32.gmra.mxu0 %v596
    %v598 = vpop.f32.mrf.mxu0
    %v599 = vadd.f32 %v498, %v598
    %600 = vdwg.mxu0
    %v601 = vand.u32 %v112, 4294901760
    %v602 = vsub.f32 %v112, %v601
    %603 = vmatpush.msra.mxu0 %v602
    %v604 = vand.u32 %v111, 4294901760
    %v605 = vsub.f32 %v111, %v604
    %606 = vmatpush.msra.mxu0 %v605
    %v607 = vand.u32 %v110, 4294901760
    %v608 = vsub.f32 %v110, %v607
    %609 = vmatpush.msra.mxu0 %v608
    %v610 = vand.u32 %v109, 4294901760
    %v611 = vsub.f32 %v109, %v610
    %612 = vmatpush.msra.mxu0 %v611
    %v613 = vand.u32 %v108, 4294901760
    %v614 = vsub.f32 %v108, %v613
    %615 = vmatpush.msra.mxu0 %v614
    %v616 = vand.u32 %v107, 4294901760
    %v617 = vsub.f32 %v107, %v616
    %618 = vmatpush.msra.mxu0 %v617
    %v619 = vand.u32 %v106, 4294901760
    %v620 = vsub.f32 %v106, %v619
    %621 = vmatpush.msra.mxu0 %v620
    %v622 = vand.u32 %v105, 4294901760
    %v623 = vsub.f32 %v105, %v622
    %624 = vmatpush.msra.mxu0 %v623
    %v625 = vand.u32 %v104, 4294901760
    %v626 = vsub.f32 %v104, %v625
    %627 = vmatpush.msra.mxu0 %v626
    %v628 = vand.u32 %v103, 4294901760
    %v629 = vsub.f32 %v103, %v628
    %630 = vmatpush.msra.mxu0 %v629
    %v631 = vand.u32 %v102, 4294901760
    %v632 = vsub.f32 %v102, %v631
    %633 = vmatpush.msra.mxu0 %v632
    %v634 = vand.u32 %v101, 4294901760
    %v635 = vsub.f32 %v101, %v634
    %636 = vmatpush.msra.mxu0 %v635
    %v637 = vand.u32 %v100, 4294901760
    %v638 = vsub.f32 %v100, %v637
    %639 = vmatpush.msra.mxu0 %v638
    %v640 = vand.u32 %v99, 4294901760
    %v641 = vsub.f32 %v99, %v640
    %642 = vmatpush.msra.mxu0 %v641
    %v643 = vand.u32 %v98, 4294901760
    %v644 = vsub.f32 %v98, %v643
    %645 = vmatpush.msra.mxu0 %v644
    %v646 = vand.u32 %v97, 4294901760
    %v647 = vsub.f32 %v97, %v646
    %648 = vmatpush.msra.mxu0 %v647
    %v649 = vand.u32 %v115, 4294901760
    %v650 = vsub.f32 %v115, %v649
    %651 = vmatmul.f32.gmra.mxu0 %v650
    %v652 = vpop.f32.mrf.mxu0
    %v653 = vadd.f32 %v599, %v652
    %654 = vdwg.mxu0
    %v655 = vand.u32 %v112, 4294901760
    %656 = vmatpush.msra.mxu0 %v655
    %v657 = vand.u32 %v111, 4294901760
    %658 = vmatpush.msra.mxu0 %v657
    %v659 = vand.u32 %v110, 4294901760
    %660 = vmatpush.msra.mxu0 %v659
    %v661 = vand.u32 %v109, 4294901760
    %662 = vmatpush.msra.mxu0 %v661
    %v663 = vand.u32 %v108, 4294901760
    %664 = vmatpush.msra.mxu0 %v663
    %v665 = vand.u32 %v107, 4294901760
    %666 = vmatpush.msra.mxu0 %v665
    %v667 = vand.u32 %v106, 4294901760
    %668 = vmatpush.msra.mxu0 %v667
    %v669 = vand.u32 %v105, 4294901760
    %670 = vmatpush.msra.mxu0 %v669
    %v671 = vand.u32 %v104, 4294901760
    %672 = vmatpush.msra.mxu0 %v671
    %v673 = vand.u32 %v103, 4294901760
    %674 = vmatpush.msra.mxu0 %v673
    %v675 = vand.u32 %v102, 4294901760
    %676 = vmatpush.msra.mxu0 %v675
    %v677 = vand.u32 %v101, 4294901760
    %678 = vmatpush.msra.mxu0 %v677
    %v679 = vand.u32 %v100, 4294901760
    %680 = vmatpush.msra.mxu0 %v679
    %v681 = vand.u32 %v99, 4294901760
    %682 = vmatpush.msra.mxu0 %v681
    %v683 = vand.u32 %v98, 4294901760
    %684 = vmatpush.msra.mxu0 %v683
    %v685 = vand.u32 %v97, 4294901760
    %686 = vmatpush.msra.mxu0 %v685
    %v687 = vand.u32 %v115, 4294901760
    %v688 = vsub.f32 %v115, %v687
    %v689 = vand.u32 %v688, 4294901760
    %690 = vmatmul.f32.gmra.mxu0 %v689
    %v691 = vpop.f32.mrf.mxu0
    %v692 = vadd.f32 %v653, %v691
    %693 = vdwg.mxu0
    %v694 = vand.u32 %v112, 4294901760
    %v695 = vsub.f32 %v112, %v694
    %v696 = vand.u32 %v695, 4294901760
    %697 = vmatpush.msra.mxu0 %v696
    %v698 = vand.u32 %v111, 4294901760
    %v699 = vsub.f32 %v111, %v698
    %v700 = vand.u32 %v699, 4294901760
    %701 = vmatpush.msra.mxu0 %v700
    %v702 = vand.u32 %v110, 4294901760
    %v703 = vsub.f32 %v110, %v702
    %v704 = vand.u32 %v703, 4294901760
    %705 = vmatpush.msra.mxu0 %v704
    %v706 = vand.u32 %v109, 4294901760
    %v707 = vsub.f32 %v109, %v706
    %v708 = vand.u32 %v707, 4294901760
    %709 = vmatpush.msra.mxu0 %v708
    %v710 = vand.u32 %v108, 4294901760
    %v711 = vsub.f32 %v108, %v710
    %v712 = vand.u32 %v711, 4294901760
    %713 = vmatpush.msra.mxu0 %v712
    %v714 = vand.u32 %v107, 4294901760
    %v715 = vsub.f32 %v107, %v714
    %v716 = vand.u32 %v715, 4294901760
    %717 = vmatpush.msra.mxu0 %v716
    %v718 = vand.u32 %v106, 4294901760
    %v719 = vsub.f32 %v106, %v718
    %v720 = vand.u32 %v719, 4294901760
    %721 = vmatpush.msra.mxu0 %v720
    %v722 = vand.u32 %v105, 4294901760
    %v723 = vsub.f32 %v105, %v722
    %v724 = vand.u32 %v723, 4294901760
    %725 = vmatpush.msra.mxu0 %v724
    %v726 = vand.u32 %v104, 4294901760
    %v727 = vsub.f32 %v104, %v726
    %v728 = vand.u32 %v727, 4294901760
    %729 = vmatpush.msra.mxu0 %v728
    %v730 = vand.u32 %v103, 4294901760
    %v731 = vsub.f32 %v103, %v730
    %v732 = vand.u32 %v731, 4294901760
    %733 = vmatpush.msra.mxu0 %v732
    %v734 = vand.u32 %v102, 4294901760
    %v735 = vsub.f32 %v102, %v734
    %v736 = vand.u32 %v735, 4294901760
    %737 = vmatpush.msra.mxu0 %v736
    %v738 = vand.u32 %v101, 4294901760
    %v739 = vsub.f32 %v101, %v738
    %v740 = vand.u32 %v739, 4294901760
    %741 = vmatpush.msra.mxu0 %v740
    %v742 = vand.u32 %v100, 4294901760
    %v743 = vsub.f32 %v100, %v742
    %v744 = vand.u32 %v743, 4294901760
    %745 = vmatpush.msra.mxu0 %v744
    %v746 = vand.u32 %v99, 4294901760
    %v747 = vsub.f32 %v99, %v746
    %v748 = vand.u32 %v747, 4294901760
    %749 = vmatpush.msra.mxu0 %v748
    %v750 = vand.u32 %v98, 4294901760
    %v751 = vsub.f32 %v98, %v750
    %v752 = vand.u32 %v751, 4294901760
    %753 = vmatpush.msra.mxu0 %v752
    %v754 = vand.u32 %v97, 4294901760
    %v755 = vsub.f32 %v97, %v754
    %v756 = vand.u32 %v755, 4294901760
    %757 = vmatpush.msra.mxu0 %v756
    %v758 = vand.u32 %v115, 4294901760
    %759 = vmatmul.f32.gmra.mxu0 %v758
    %v760 = vpop.f32.mrf.mxu0
    %v761 = vadd.f32 %v692, %v760
    %762 = vdwg.mxu0
    %v763 = vand.u32 %v112, 4294901760
    %764 = vmatpush.msra.mxu0 %v763
    %v765 = vand.u32 %v111, 4294901760
    %766 = vmatpush.msra.mxu0 %v765
    %v767 = vand.u32 %v110, 4294901760
    %768 = vmatpush.msra.mxu0 %v767
    %v769 = vand.u32 %v109, 4294901760
    %770 = vmatpush.msra.mxu0 %v769
    %v771 = vand.u32 %v108, 4294901760
    %772 = vmatpush.msra.mxu0 %v771
    %v773 = vand.u32 %v107, 4294901760
    %774 = vmatpush.msra.mxu0 %v773
    %v775 = vand.u32 %v106, 4294901760
    %776 = vmatpush.msra.mxu0 %v775
    %v777 = vand.u32 %v105, 4294901760
    %778 = vmatpush.msra.mxu0 %v777
    %v779 = vand.u32 %v104, 4294901760
    %780 = vmatpush.msra.mxu0 %v779
    %v781 = vand.u32 %v103, 4294901760
    %782 = vmatpush.msra.mxu0 %v781
    %v783 = vand.u32 %v102, 4294901760
    %784 = vmatpush.msra.mxu0 %v783
    %v785 = vand.u32 %v101, 4294901760
    %786 = vmatpush.msra.mxu0 %v785
    %v787 = vand.u32 %v100, 4294901760
    %788 = vmatpush.msra.mxu0 %v787
    %v789 = vand.u32 %v99, 4294901760
    %790 = vmatpush.msra.mxu0 %v789
    %v791 = vand.u32 %v98, 4294901760
    %792 = vmatpush.msra.mxu0 %v791
    %v793 = vand.u32 %v97, 4294901760
    %794 = vmatpush.msra.mxu0 %v793
    %v795 = vand.u32 %v115, 4294901760
    %796 = vmatmul.f32.gmra.mxu0 %v795
    %v797 = vpop.f32.mrf.mxu0
    %v798 = vadd.f32 %v761, %v797
    %799 = vdwg.mxu0
    %v800 = vld [vmem:[#allocation9] sm:$0xff]
    %v801 = vld [vmem:[#allocation9 + $0x8] sm:$0xff]
    %v802 = vld [vmem:[#allocation9 + $0x10] sm:$0xff]
    %v803 = vld [vmem:[#allocation9 + $0x18] sm:$0xff]
    %v804 = vld [vmem:[#allocation9 + $0x20] sm:$0xff]
    %v805 = vld [vmem:[#allocation9 + $0x28] sm:$0xff]
    %v806 = vld [vmem:[#allocation9 + $0x30] sm:$0xff]
    %v807 = vld [vmem:[#allocation9 + $0x38] sm:$0xff]
    %v808 = vld [vmem:[#allocation9 + $0x40] sm:$0xff]
    %v809 = vld [vmem:[#allocation9 + $0x48] sm:$0xff]
    %v810 = vld [vmem:[#allocation9 + $0x50] sm:$0xff]
    %v811 = vld [vmem:[#allocation9 + $0x58] sm:$0xff]
    %v812 = vld [vmem:[#allocation9 + $0x60] sm:$0xff]
    %v813 = vld [vmem:[#allocation9 + $0x68] sm:$0xff]
    %v814 = vld [vmem:[#allocation9 + $0x70] sm:$0xff]
    %v815 = vld [vmem:[#allocation9 + $0x78] sm:$0xff]
    %v816 = vld [vmem:[#allocation9 + $0x80] sm:$0xff]
    %v817 = vld [vmem:[#allocation9 + $0x88] sm:$0xff]
    %v818 = vld [vmem:[#allocation9 + $0x90] sm:$0xff]
    %v819 = vld [vmem:[#allocation9 + $0x98] sm:$0xff]
    %v820 = vld [vmem:[#allocation9 + $0xa0] sm:$0xff]
    %v821 = vld [vmem:[#allocation9 + $0xa8] sm:$0xff]
    %v822 = vld [vmem:[#allocation9 + $0xb0] sm:$0xff]
    %v823 = vld [vmem:[#allocation9 + $0xb8] sm:$0xff]
    %v824 = vld [vmem:[#allocation9 + $0xc0] sm:$0xff]
    %v825 = vld [vmem:[#allocation9 + $0xc8] sm:$0xff]
    %v826 = vld [vmem:[#allocation9 + $0xd0] sm:$0xff]
    %v827 = vld [vmem:[#allocation9 + $0xd8] sm:$0xff]
    %v828 = vld [vmem:[#allocation9 + $0xe0] sm:$0xff]
    %v829 = vld [vmem:[#allocation9 + $0xe8] sm:$0xff]
    %v830 = vld [vmem:[#allocation9 + $0xf0] sm:$0xff]
    %v831 = vld [vmem:[#allocation9 + $0xf8] sm:$0xff]
    %v832 = vand.u32 %v815, 4294901760
    %833 = vmatpush.msra.mxu0 %v832
    %v834 = vand.u32 %v814, 4294901760
    %835 = vmatpush.msra.mxu0 %v834
    %v836 = vand.u32 %v813, 4294901760
    %837 = vmatpush.msra.mxu0 %v836
    %v838 = vand.u32 %v812, 4294901760
    %839 = vmatpush.msra.mxu0 %v838
    %v840 = vand.u32 %v811, 4294901760
    %841 = vmatpush.msra.mxu0 %v840
    %v842 = vand.u32 %v810, 4294901760
    %843 = vmatpush.msra.mxu0 %v842
    %v844 = vand.u32 %v809, 4294901760
    %845 = vmatpush.msra.mxu0 %v844
    %v846 = vand.u32 %v808, 4294901760
    %847 = vmatpush.msra.mxu0 %v846
    %v848 = vand.u32 %v807, 4294901760
    %849 = vmatpush.msra.mxu0 %v848
    %v850 = vand.u32 %v806, 4294901760
    %851 = vmatpush.msra.mxu0 %v850
    %v852 = vand.u32 %v805, 4294901760
    %853 = vmatpush.msra.mxu0 %v852
    %v854 = vand.u32 %v804, 4294901760
    %855 = vmatpush.msra.mxu0 %v854
    %v856 = vand.u32 %v803, 4294901760
    %857 = vmatpush.msra.mxu0 %v856
    %v858 = vand.u32 %v802, 4294901760
    %859 = vmatpush.msra.mxu0 %v858
    %v860 = vand.u32 %v801, 4294901760
    %861 = vmatpush.msra.mxu0 %v860
    %v862 = vand.u32 %v800, 4294901760
    %863 = vmatpush.msra.mxu0 %v862
    %v864 = vand.u32 %v114, 4294901760
    %v865 = vsub.f32 %v114, %v864
    %v866 = vand.u32 %v865, 4294901760
    %v867 = vsub.f32 %v865, %v866
    %v868 = vand.u32 %v867, 4294901760
    %869 = vmatmul.f32.gmra.mxu0 %v868
    %v870 = vpop.f32.mrf.mxu0
    %v871 = vadd.f32 0.0, %v870
    %872 = vdwg.mxu0
    %v873 = vand.u32 %v815, 4294901760
    %v874 = vsub.f32 %v815, %v873
    %v875 = vand.u32 %v874, 4294901760
    %v876 = vsub.f32 %v874, %v875
    %v877 = vand.u32 %v876, 4294901760
    %878 = vmatpush.msra.mxu0 %v877
    %v879 = vand.u32 %v814, 4294901760
    %v880 = vsub.f32 %v814, %v879
    %v881 = vand.u32 %v880, 4294901760
    %v882 = vsub.f32 %v880, %v881
    %v883 = vand.u32 %v882, 4294901760
    %884 = vmatpush.msra.mxu0 %v883
    %v885 = vand.u32 %v813, 4294901760
    %v886 = vsub.f32 %v813, %v885
    %v887 = vand.u32 %v886, 4294901760
    %v888 = vsub.f32 %v886, %v887
    %v889 = vand.u32 %v888, 4294901760
    %890 = vmatpush.msra.mxu0 %v889
    %v891 = vand.u32 %v812, 4294901760
    %v892 = vsub.f32 %v812, %v891
    %v893 = vand.u32 %v892, 4294901760
    %v894 = vsub.f32 %v892, %v893
    %v895 = vand.u32 %v894, 4294901760
    %896 = vmatpush.msra.mxu0 %v895
    %v897 = vand.u32 %v811, 4294901760
    %v898 = vsub.f32 %v811, %v897
    %v899 = vand.u32 %v898, 4294901760
    %v900 = vsub.f32 %v898, %v899
    %v901 = vand.u32 %v900, 4294901760
    %902 = vmatpush.msra.mxu0 %v901
    %v903 = vand.u32 %v810, 4294901760
    %v904 = vsub.f32 %v810, %v903
    %v905 = vand.u32 %v904, 4294901760
    %v906 = vsub.f32 %v904, %v905
    %v907 = vand.u32 %v906, 4294901760
    %908 = vmatpush.msra.mxu0 %v907
    %v909 = vand.u32 %v809, 4294901760
    %v910 = vsub.f32 %v809, %v909
    %v911 = vand.u32 %v910, 4294901760
    %v912 = vsub.f32 %v910, %v911
    %v913 = vand.u32 %v912, 4294901760
    %914 = vmatpush.msra.mxu0 %v913
    %v915 = vand.u32 %v808, 4294901760
    %v916 = vsub.f32 %v808, %v915
    %v917 = vand.u32 %v916, 4294901760
    %v918 = vsub.f32 %v916, %v917
    %v919 = vand.u32 %v918, 4294901760
    %920 = vmatpush.msra.mxu0 %v919
    %v921 = vand.u32 %v807, 4294901760
    %v922 = vsub.f32 %v807, %v921
    %v923 = vand.u32 %v922, 4294901760
    %v924 = vsub.f32 %v922, %v923
    %v925 = vand.u32 %v924, 4294901760
    %926 = vmatpush.msra.mxu0 %v925
    %v927 = vand.u32 %v806, 4294901760
    %v928 = vsub.f32 %v806, %v927
    %v929 = vand.u32 %v928, 4294901760
    %v930 = vsub.f32 %v928, %v929
    %v931 = vand.u32 %v930, 4294901760
    %932 = vmatpush.msra.mxu0 %v931
    %v933 = vand.u32 %v805, 4294901760
    %v934 = vsub.f32 %v805, %v933
    %v935 = vand.u32 %v934, 4294901760
    %v936 = vsub.f32 %v934, %v935
    %v937 = vand.u32 %v936, 4294901760
    %938 = vmatpush.msra.mxu0 %v937
    %v939 = vand.u32 %v804, 4294901760
    %v940 = vsub.f32 %v804, %v939
    %v941 = vand.u32 %v940, 4294901760
    %v942 = vsub.f32 %v940, %v941
    %v943 = vand.u32 %v942, 4294901760
    %944 = vmatpush.msra.mxu0 %v943
    %v945 = vand.u32 %v803, 4294901760
    %v946 = vsub.f32 %v803, %v945
    %v947 = vand.u32 %v946, 4294901760
    %v948 = vsub.f32 %v946, %v947
    %v949 = vand.u32 %v948, 4294901760
    %950 = vmatpush.msra.mxu0 %v949
    %v951 = vand.u32 %v802, 4294901760
    %v952 = vsub.f32 %v802, %v951
    %v953 = vand.u32 %v952, 4294901760
    %v954 = vsub.f32 %v952, %v953
    %v955 = vand.u32 %v954, 4294901760
    %956 = vmatpush.msra.mxu0 %v955
    %v957 = vand.u32 %v801, 4294901760
    %v958 = vsub.f32 %v801, %v957
    %v959 = vand.u32 %v958, 4294901760
    %v960 = vsub.f32 %v958, %v959
    %v961 = vand.u32 %v960, 4294901760
    %962 = vmatpush.msra.mxu0 %v961
    %v963 = vand.u32 %v800, 4294901760
    %v964 = vsub.f32 %v800, %v963
    %v965 = vand.u32 %v964, 4294901760
    %v966 = vsub.f32 %v964, %v965
    %v967 = vand.u32 %v966, 4294901760
    %968 = vmatpush.msra.mxu0 %v967
    %v969 = vand.u32 %v114, 4294901760
    %970 = vmatmul.f32.gmra.mxu0 %v969
    %v971 = vpop.f32.mrf.mxu0
    %v972 = vadd.f32 %v871, %v971
    %973 = vdwg.mxu0
    %v974 = vand.u32 %v815, 4294901760
    %v975 = vsub.f32 %v815, %v974
    %976 = vmatpush.msra.mxu0 %v975
    %v977 = vand.u32 %v814, 4294901760
    %v978 = vsub.f32 %v814, %v977
    %979 = vmatpush.msra.mxu0 %v978
    %v980 = vand.u32 %v813, 4294901760
    %v981 = vsub.f32 %v813, %v980
    %982 = vmatpush.msra.mxu0 %v981
    %v983 = vand.u32 %v812, 4294901760
    %v984 = vsub.f32 %v812, %v983
    %985 = vmatpush.msra.mxu0 %v984
    %v986 = vand.u32 %v811, 4294901760
    %v987 = vsub.f32 %v811, %v986
    %988 = vmatpush.msra.mxu0 %v987
    %v989 = vand.u32 %v810, 4294901760
    %v990 = vsub.f32 %v810, %v989
    %991 = vmatpush.msra.mxu0 %v990
    %v992 = vand.u32 %v809, 4294901760
    %v993 = vsub.f32 %v809, %v992
    %994 = vmatpush.msra.mxu0 %v993
    %v995 = vand.u32 %v808, 4294901760
    %v996 = vsub.f32 %v808, %v995
    %997 = vmatpush.msra.mxu0 %v996
    %v998 = vand.u32 %v807, 4294901760
    %v999 = vsub.f32 %v807, %v998
    %1000 = vmatpush.msra.mxu0 %v999
    %v1001 = vand.u32 %v806, 4294901760
    %v1002 = vsub.f32 %v806, %v1001
    %1003 = vmatpush.msra.mxu0 %v1002
    %v1004 = vand.u32 %v805, 4294901760
    %v1005 = vsub.f32 %v805, %v1004
    %1006 = vmatpush.msra.mxu0 %v1005
    %v1007 = vand.u32 %v804, 4294901760
    %v1008 = vsub.f32 %v804, %v1007
    %1009 = vmatpush.msra.mxu0 %v1008
    %v1010 = vand.u32 %v803, 4294901760
    %v1011 = vsub.f32 %v803, %v1010
    %1012 = vmatpush.msra.mxu0 %v1011
    %v1013 = vand.u32 %v802, 4294901760
    %v1014 = vsub.f32 %v802, %v1013
    %1015 = vmatpush.msra.mxu0 %v1014
    %v1016 = vand.u32 %v801, 4294901760
    %v1017 = vsub.f32 %v801, %v1016
    %1018 = vmatpush.msra.mxu0 %v1017
    %v1019 = vand.u32 %v800, 4294901760
    %v1020 = vsub.f32 %v800, %v1019
    %1021 = vmatpush.msra.mxu0 %v1020
    %v1022 = vand.u32 %v114, 4294901760
    %v1023 = vsub.f32 %v114, %v1022
    %1024 = vmatmul.f32.gmra.mxu0 %v1023
    %v1025 = vpop.f32.mrf.mxu0
    %v1026 = vadd.f32 %v972, %v1025
    %1027 = vdwg.mxu0
    %v1028 = vand.u32 %v815, 4294901760
    %1029 = vmatpush.msra.mxu0 %v1028
    %v1030 = vand.u32 %v814, 4294901760
    %1031 = vmatpush.msra.mxu0 %v1030
    %v1032 = vand.u32 %v813, 4294901760
    %1033 = vmatpush.msra.mxu0 %v1032
    %v1034 = vand.u32 %v812, 4294901760
    %1035 = vmatpush.msra.mxu0 %v1034
    %v1036 = vand.u32 %v811, 4294901760
    %1037 = vmatpush.msra.mxu0 %v1036
    %v1038 = vand.u32 %v810, 4294901760
    %1039 = vmatpush.msra.mxu0 %v1038
    %v1040 = vand.u32 %v809, 4294901760
    %1041 = vmatpush.msra.mxu0 %v1040
    %v1042 = vand.u32 %v808, 4294901760
    %1043 = vmatpush.msra.mxu0 %v1042
    %v1044 = vand.u32 %v807, 4294901760
    %1045 = vmatpush.msra.mxu0 %v1044
    %v1046 = vand.u32 %v806, 4294901760
    %1047 = vmatpush.msra.mxu0 %v1046
    %v1048 = vand.u32 %v805, 4294901760
    %1049 = vmatpush.msra.mxu0 %v1048
    %v1050 = vand.u32 %v804, 4294901760
    %1051 = vmatpush.msra.mxu0 %v1050
    %v1052 = vand.u32 %v803, 4294901760
    %1053 = vmatpush.msra.mxu0 %v1052
    %v1054 = vand.u32 %v802, 4294901760
    %1055 = vmatpush.msra.mxu0 %v1054
    %v1056 = vand.u32 %v801, 4294901760
    %1057 = vmatpush.msra.mxu0 %v1056
    %v1058 = vand.u32 %v800, 4294901760
    %1059 = vmatpush.msra.mxu0 %v1058
    %v1060 = vand.u32 %v114, 4294901760
    %v1061 = vsub.f32 %v114, %v1060
    %v1062 = vand.u32 %v1061, 4294901760
    %1063 = vmatmul.f32.gmra.mxu0 %v1062
    %v1064 = vpop.f32.mrf.mxu0
    %v1065 = vadd.f32 %v1026, %v1064
    %1066 = vdwg.mxu0
    %v1067 = vand.u32 %v815, 4294901760
    %v1068 = vsub.f32 %v815, %v1067
    %v1069 = vand.u32 %v1068, 4294901760
    %1070 = vmatpush.msra.mxu0 %v1069
    %v1071 = vand.u32 %v814, 4294901760
    %v1072 = vsub.f32 %v814, %v1071
    %v1073 = vand.u32 %v1072, 4294901760
    %1074 = vmatpush.msra.mxu0 %v1073
    %v1075 = vand.u32 %v813, 4294901760
    %v1076 = vsub.f32 %v813, %v1075
    %v1077 = vand.u32 %v1076, 4294901760
    %1078 = vmatpush.msra.mxu0 %v1077
    %v1079 = vand.u32 %v812, 4294901760
    %v1080 = vsub.f32 %v812, %v1079
    %v1081 = vand.u32 %v1080, 4294901760
    %1082 = vmatpush.msra.mxu0 %v1081
    %v1083 = vand.u32 %v811, 4294901760
    %v1084 = vsub.f32 %v811, %v1083
    %v1085 = vand.u32 %v1084, 4294901760
    %1086 = vmatpush.msra.mxu0 %v1085
    %v1087 = vand.u32 %v810, 4294901760
    %v1088 = vsub.f32 %v810, %v1087
    %v1089 = vand.u32 %v1088, 4294901760
    %1090 = vmatpush.msra.mxu0 %v1089
    %v1091 = vand.u32 %v809, 4294901760
    %v1092 = vsub.f32 %v809, %v1091
    %v1093 = vand.u32 %v1092, 4294901760
    %1094 = vmatpush.msra.mxu0 %v1093
    %v1095 = vand.u32 %v808, 4294901760
    %v1096 = vsub.f32 %v808, %v1095
    %v1097 = vand.u32 %v1096, 4294901760
    %1098 = vmatpush.msra.mxu0 %v1097
    %v1099 = vand.u32 %v807, 4294901760
    %v1100 = vsub.f32 %v807, %v1099
    %v1101 = vand.u32 %v1100, 4294901760
    %1102 = vmatpush.msra.mxu0 %v1101
    %v1103 = vand.u32 %v806, 4294901760
    %v1104 = vsub.f32 %v806, %v1103
    %v1105 = vand.u32 %v1104, 4294901760
    %1106 = vmatpush.msra.mxu0 %v1105
    %v1107 = vand.u32 %v805, 4294901760
    %v1108 = vsub.f32 %v805, %v1107
    %v1109 = vand.u32 %v1108, 4294901760
    %1110 = vmatpush.msra.mxu0 %v1109
    %v1111 = vand.u32 %v804, 4294901760
    %v1112 = vsub.f32 %v804, %v1111
    %v1113 = vand.u32 %v1112, 4294901760
    %1114 = vmatpush.msra.mxu0 %v1113
    %v1115 = vand.u32 %v803, 4294901760
    %v1116 = vsub.f32 %v803, %v1115
    %v1117 = vand.u32 %v1116, 4294901760
    %1118 = vmatpush.msra.mxu0 %v1117
    %v1119 = vand.u32 %v802, 4294901760
    %v1120 = vsub.f32 %v802, %v1119
    %v1121 = vand.u32 %v1120, 4294901760
    %1122 = vmatpush.msra.mxu0 %v1121
    %v1123 = vand.u32 %v801, 4294901760
    %v1124 = vsub.f32 %v801, %v1123
    %v1125 = vand.u32 %v1124, 4294901760
    %1126 = vmatpush.msra.mxu0 %v1125
    %v1127 = vand.u32 %v800, 4294901760
    %v1128 = vsub.f32 %v800, %v1127
    %v1129 = vand.u32 %v1128, 4294901760
    %1130 = vmatpush.msra.mxu0 %v1129
    %v1131 = vand.u32 %v114, 4294901760
    %1132 = vmatmul.f32.gmra.mxu0 %v1131
    %v1133 = vpop.f32.mrf.mxu0
    %v1134 = vadd.f32 %v1065, %v1133
    %1135 = vdwg.mxu0
    %v1136 = vand.u32 %v815, 4294901760
    %1137 = vmatpush.msra.mxu0 %v1136
    %v1138 = vand.u32 %v814, 4294901760
    %1139 = vmatpush.msra.mxu0 %v1138
    %v1140 = vand.u32 %v813, 4294901760
    %1141 = vmatpush.msra.mxu0 %v1140
    %v1142 = vand.u32 %v812, 4294901760
    %1143 = vmatpush.msra.mxu0 %v1142
    %v1144 = vand.u32 %v811, 4294901760
    %1145 = vmatpush.msra.mxu0 %v1144
    %v1146 = vand.u32 %v810, 4294901760
    %1147 = vmatpush.msra.mxu0 %v1146
    %v1148 = vand.u32 %v809, 4294901760
    %1149 = vmatpush.msra.mxu0 %v1148
    %v1150 = vand.u32 %v808, 4294901760
    %1151 = vmatpush.msra.mxu0 %v1150
    %v1152 = vand.u32 %v807, 4294901760
    %1153 = vmatpush.msra.mxu0 %v1152
    %v1154 = vand.u32 %v806, 4294901760
    %1155 = vmatpush.msra.mxu0 %v1154
    %v1156 = vand.u32 %v805, 4294901760
    %1157 = vmatpush.msra.mxu0 %v1156
    %v1158 = vand.u32 %v804, 4294901760
    %1159 = vmatpush.msra.mxu0 %v1158
    %v1160 = vand.u32 %v803, 4294901760
    %1161 = vmatpush.msra.mxu0 %v1160
    %v1162 = vand.u32 %v802, 4294901760
    %1163 = vmatpush.msra.mxu0 %v1162
    %v1164 = vand.u32 %v801, 4294901760
    %1165 = vmatpush.msra.mxu0 %v1164
    %v1166 = vand.u32 %v800, 4294901760
    %1167 = vmatpush.msra.mxu0 %v1166
    %v1168 = vand.u32 %v114, 4294901760
    %1169 = vmatmul.f32.gmra.mxu0 %v1168
    %v1170 = vpop.f32.mrf.mxu0
    %v1171 = vadd.f32 %v1134, %v1170
    %1172 = vdwg.mxu0
    %v1173 = vand.u32 %v831, 4294901760
    %1174 = vmatpush.msra.mxu0 %v1173
    %v1175 = vand.u32 %v830, 4294901760
    %1176 = vmatpush.msra.mxu0 %v1175
    %v1177 = vand.u32 %v829, 4294901760
    %1178 = vmatpush.msra.mxu0 %v1177
    %v1179 = vand.u32 %v828, 4294901760
    %1180 = vmatpush.msra.mxu0 %v1179
    %v1181 = vand.u32 %v827, 4294901760
    %1182 = vmatpush.msra.mxu0 %v1181
    %v1183 = vand.u32 %v826, 4294901760
    %1184 = vmatpush.msra.mxu0 %v1183
    %v1185 = vand.u32 %v825, 4294901760
    %1186 = vmatpush.msra.mxu0 %v1185
    %v1187 = vand.u32 %v824, 4294901760
    %1188 = vmatpush.msra.mxu0 %v1187
    %v1189 = vand.u32 %v823, 4294901760
    %1190 = vmatpush.msra.mxu0 %v1189
    %v1191 = vand.u32 %v822, 4294901760
    %1192 = vmatpush.msra.mxu0 %v1191
    %v1193 = vand.u32 %v821, 4294901760
    %1194 = vmatpush.msra.mxu0 %v1193
    %v1195 = vand.u32 %v820, 4294901760
    %1196 = vmatpush.msra.mxu0 %v1195
    %v1197 = vand.u32 %v819, 4294901760
    %1198 = vmatpush.msra.mxu0 %v1197
    %v1199 = vand.u32 %v818, 4294901760
    %1200 = vmatpush.msra.mxu0 %v1199
    %v1201 = vand.u32 %v817, 4294901760
    %1202 = vmatpush.msra.mxu0 %v1201
    %v1203 = vand.u32 %v816, 4294901760
    %1204 = vmatpush.msra.mxu0 %v1203
    %v1205 = vand.u32 %v115, 4294901760
    %v1206 = vsub.f32 %v115, %v1205
    %v1207 = vand.u32 %v1206, 4294901760
    %v1208 = vsub.f32 %v1206, %v1207
    %v1209 = vand.u32 %v1208, 4294901760
    %1210 = vmatmul.f32.gmra.mxu0 %v1209
    %v1211 = vpop.f32.mrf.mxu0
    %v1212 = vadd.f32 %v1171, %v1211
    %1213 = vdwg.mxu0
    %v1214 = vand.u32 %v831, 4294901760
    %v1215 = vsub.f32 %v831, %v1214
    %v1216 = vand.u32 %v1215, 4294901760
    %v1217 = vsub.f32 %v1215, %v1216
    %v1218 = vand.u32 %v1217, 4294901760
    %1219 = vmatpush.msra.mxu0 %v1218
    %v1220 = vand.u32 %v830, 4294901760
    %v1221 = vsub.f32 %v830, %v1220
    %v1222 = vand.u32 %v1221, 4294901760
    %v1223 = vsub.f32 %v1221, %v1222
    %v1224 = vand.u32 %v1223, 4294901760
    %1225 = vmatpush.msra.mxu0 %v1224
    %v1226 = vand.u32 %v829, 4294901760
    %v1227 = vsub.f32 %v829, %v1226
    %v1228 = vand.u32 %v1227, 4294901760
    %v1229 = vsub.f32 %v1227, %v1228
    %v1230 = vand.u32 %v1229, 4294901760
    %1231 = vmatpush.msra.mxu0 %v1230
    %v1232 = vand.u32 %v828, 4294901760
    %v1233 = vsub.f32 %v828, %v1232
    %v1234 = vand.u32 %v1233, 4294901760
    %v1235 = vsub.f32 %v1233, %v1234
    %v1236 = vand.u32 %v1235, 4294901760
    %1237 = vmatpush.msra.mxu0 %v1236
    %v1238 = vand.u32 %v827, 4294901760
    %v1239 = vsub.f32 %v827, %v1238
    %v1240 = vand.u32 %v1239, 4294901760
    %v1241 = vsub.f32 %v1239, %v1240
    %v1242 = vand.u32 %v1241, 4294901760
    %1243 = vmatpush.msra.mxu0 %v1242
    %v1244 = vand.u32 %v826, 4294901760
    %v1245 = vsub.f32 %v826, %v1244
    %v1246 = vand.u32 %v1245, 4294901760
    %v1247 = vsub.f32 %v1245, %v1246
    %v1248 = vand.u32 %v1247, 4294901760
    %1249 = vmatpush.msra.mxu0 %v1248
    %v1250 = vand.u32 %v825, 4294901760
    %v1251 = vsub.f32 %v825, %v1250
    %v1252 = vand.u32 %v1251, 4294901760
    %v1253 = vsub.f32 %v1251, %v1252
    %v1254 = vand.u32 %v1253, 4294901760
    %1255 = vmatpush.msra.mxu0 %v1254
    %v1256 = vand.u32 %v824, 4294901760
    %v1257 = vsub.f32 %v824, %v1256
    %v1258 = vand.u32 %v1257, 4294901760
    %v1259 = vsub.f32 %v1257, %v1258
    %v1260 = vand.u32 %v1259, 4294901760
    %1261 = vmatpush.msra.mxu0 %v1260
    %v1262 = vand.u32 %v823, 4294901760
    %v1263 = vsub.f32 %v823, %v1262
    %v1264 = vand.u32 %v1263, 4294901760
    %v1265 = vsub.f32 %v1263, %v1264
    %v1266 = vand.u32 %v1265, 4294901760
    %1267 = vmatpush.msra.mxu0 %v1266
    %v1268 = vand.u32 %v822, 4294901760
    %v1269 = vsub.f32 %v822, %v1268
    %v1270 = vand.u32 %v1269, 4294901760
    %v1271 = vsub.f32 %v1269, %v1270
    %v1272 = vand.u32 %v1271, 4294901760
    %1273 = vmatpush.msra.mxu0 %v1272
    %v1274 = vand.u32 %v821, 4294901760
    %v1275 = vsub.f32 %v821, %v1274
    %v1276 = vand.u32 %v1275, 4294901760
    %v1277 = vsub.f32 %v1275, %v1276
    %v1278 = vand.u32 %v1277, 4294901760
    %1279 = vmatpush.msra.mxu0 %v1278
    %v1280 = vand.u32 %v820, 4294901760
    %v1281 = vsub.f32 %v820, %v1280
    %v1282 = vand.u32 %v1281, 4294901760
    %v1283 = vsub.f32 %v1281, %v1282
    %v1284 = vand.u32 %v1283, 4294901760
    %1285 = vmatpush.msra.mxu0 %v1284
    %v1286 = vand.u32 %v819, 4294901760
    %v1287 = vsub.f32 %v819, %v1286
    %v1288 = vand.u32 %v1287, 4294901760
    %v1289 = vsub.f32 %v1287, %v1288
    %v1290 = vand.u32 %v1289, 4294901760
    %1291 = vmatpush.msra.mxu0 %v1290
    %v1292 = vand.u32 %v818, 4294901760
    %v1293 = vsub.f32 %v818, %v1292
    %v1294 = vand.u32 %v1293, 4294901760
    %v1295 = vsub.f32 %v1293, %v1294
    %v1296 = vand.u32 %v1295, 4294901760
    %1297 = vmatpush.msra.mxu0 %v1296
    %v1298 = vand.u32 %v817, 4294901760
    %v1299 = vsub.f32 %v817, %v1298
    %v1300 = vand.u32 %v1299, 4294901760
    %v1301 = vsub.f32 %v1299, %v1300
    %v1302 = vand.u32 %v1301, 4294901760
    %1303 = vmatpush.msra.mxu0 %v1302
    %v1304 = vand.u32 %v816, 4294901760
    %v1305 = vsub.f32 %v816, %v1304
    %v1306 = vand.u32 %v1305, 4294901760
    %v1307 = vsub.f32 %v1305, %v1306
    %v1308 = vand.u32 %v1307, 4294901760
    %1309 = vmatpush.msra.mxu0 %v1308
    %v1310 = vand.u32 %v115, 4294901760
    %1311 = vmatmul.f32.gmra.mxu0 %v1310
    %v1312 = vpop.f32.mrf.mxu0
    %v1313 = vadd.f32 %v1212, %v1312
    %1314 = vdwg.mxu0
    %v1315 = vand.u32 %v831, 4294901760
    %v1316 = vsub.f32 %v831, %v1315
    %1317 = vmatpush.msra.mxu0 %v1316
    %v1318 = vand.u32 %v830, 4294901760
    %v1319 = vsub.f32 %v830, %v1318
    %1320 = vmatpush.msra.mxu0 %v1319
    %v1321 = vand.u32 %v829, 4294901760
    %v1322 = vsub.f32 %v829, %v1321
    %1323 = vmatpush.msra.mxu0 %v1322
    %v1324 = vand.u32 %v828, 4294901760
    %v1325 = vsub.f32 %v828, %v1324
    %1326 = vmatpush.msra.mxu0 %v1325
    %v1327 = vand.u32 %v827, 4294901760
    %v1328 = vsub.f32 %v827, %v1327
    %1329 = vmatpush.msra.mxu0 %v1328
    %v1330 = vand.u32 %v826, 4294901760
    %v1331 = vsub.f32 %v826, %v1330
    %1332 = vmatpush.msra.mxu0 %v1331
    %v1333 = vand.u32 %v825, 4294901760
    %v1334 = vsub.f32 %v825, %v1333
    %1335 = vmatpush.msra.mxu0 %v1334
    %v1336 = vand.u32 %v824, 4294901760
    %v1337 = vsub.f32 %v824, %v1336
    %1338 = vmatpush.msra.mxu0 %v1337
    %v1339 = vand.u32 %v823, 4294901760
    %v1340 = vsub.f32 %v823, %v1339
    %1341 = vmatpush.msra.mxu0 %v1340
    %v1342 = vand.u32 %v822, 4294901760
    %v1343 = vsub.f32 %v822, %v1342
    %1344 = vmatpush.msra.mxu0 %v1343
    %v1345 = vand.u32 %v821, 4294901760
    %v1346 = vsub.f32 %v821, %v1345
    %1347 = vmatpush.msra.mxu0 %v1346
    %v1348 = vand.u32 %v820, 4294901760
    %v1349 = vsub.f32 %v820, %v1348
    %1350 = vmatpush.msra.mxu0 %v1349
    %v1351 = vand.u32 %v819, 4294901760
    %v1352 = vsub.f32 %v819, %v1351
    %1353 = vmatpush.msra.mxu0 %v1352
    %v1354 = vand.u32 %v818, 4294901760
    %v1355 = vsub.f32 %v818, %v1354
    %1356 = vmatpush.msra.mxu0 %v1355
    %v1357 = vand.u32 %v817, 4294901760
    %v1358 = vsub.f32 %v817, %v1357
    %1359 = vmatpush.msra.mxu0 %v1358
    %v1360 = vand.u32 %v816, 4294901760
    %v1361 = vsub.f32 %v816, %v1360
    %1362 = vmatpush.msra.mxu0 %v1361
    %v1363 = vand.u32 %v115, 4294901760
    %v1364 = vsub.f32 %v115, %v1363
    %1365 = vmatmul.f32.gmra.mxu0 %v1364
    %v1366 = vpop.f32.mrf.mxu0
    %v1367 = vadd.f32 %v1313, %v1366
    %1368 = vdwg.mxu0
    %v1369 = vand.u32 %v831, 4294901760
    %1370 = vmatpush.msra.mxu0 %v1369
    %v1371 = vand.u32 %v830, 4294901760
    %1372 = vmatpush.msra.mxu0 %v1371
    %v1373 = vand.u32 %v829, 4294901760
    %1374 = vmatpush.msra.mxu0 %v1373
    %v1375 = vand.u32 %v828, 4294901760
    %1376 = vmatpush.msra.mxu0 %v1375
    %v1377 = vand.u32 %v827, 4294901760
    %1378 = vmatpush.msra.mxu0 %v1377
    %v1379 = vand.u32 %v826, 4294901760
    %1380 = vmatpush.msra.mxu0 %v1379
    %v1381 = vand.u32 %v825, 4294901760
    %1382 = vmatpush.msra.mxu0 %v1381
    %v1383 = vand.u32 %v824, 4294901760
    %1384 = vmatpush.msra.mxu0 %v1383
    %v1385 = vand.u32 %v823, 4294901760
    %1386 = vmatpush.msra.mxu0 %v1385
    %v1387 = vand.u32 %v822, 4294901760
    %1388 = vmatpush.msra.mxu0 %v1387
    %v1389 = vand.u32 %v821, 4294901760
    %1390 = vmatpush.msra.mxu0 %v1389
    %v1391 = vand.u32 %v820, 4294901760
    %1392 = vmatpush.msra.mxu0 %v1391
    %v1393 = vand.u32 %v819, 4294901760
    %1394 = vmatpush.msra.mxu0 %v1393
    %v1395 = vand.u32 %v818, 4294901760
    %1396 = vmatpush.msra.mxu0 %v1395
    %v1397 = vand.u32 %v817, 4294901760
    %1398 = vmatpush.msra.mxu0 %v1397
    %v1399 = vand.u32 %v816, 4294901760
    %1400 = vmatpush.msra.mxu0 %v1399
    %v1401 = vand.u32 %v115, 4294901760
    %v1402 = vsub.f32 %v115, %v1401
    %v1403 = vand.u32 %v1402, 4294901760
    %1404 = vmatmul.f32.gmra.mxu0 %v1403
    %v1405 = vpop.f32.mrf.mxu0
    %v1406 = vadd.f32 %v1367, %v1405
    %1407 = vdwg.mxu0
    %v1408 = vand.u32 %v831, 4294901760
    %v1409 = vsub.f32 %v831, %v1408
    %v1410 = vand.u32 %v1409, 4294901760
    %1411 = vmatpush.msra.mxu0 %v1410
    %v1412 = vand.u32 %v830, 4294901760
    %v1413 = vsub.f32 %v830, %v1412
    %v1414 = vand.u32 %v1413, 4294901760
    %1415 = vmatpush.msra.mxu0 %v1414
    %v1416 = vand.u32 %v829, 4294901760
    %v1417 = vsub.f32 %v829, %v1416
    %v1418 = vand.u32 %v1417, 4294901760
    %1419 = vmatpush.msra.mxu0 %v1418
    %v1420 = vand.u32 %v828, 4294901760
    %v1421 = vsub.f32 %v828, %v1420
    %v1422 = vand.u32 %v1421, 4294901760
    %1423 = vmatpush.msra.mxu0 %v1422
    %v1424 = vand.u32 %v827, 4294901760
    %v1425 = vsub.f32 %v827, %v1424
    %v1426 = vand.u32 %v1425, 4294901760
    %1427 = vmatpush.msra.mxu0 %v1426
    %v1428 = vand.u32 %v826, 4294901760
    %v1429 = vsub.f32 %v826, %v1428
    %v1430 = vand.u32 %v1429, 4294901760
    %1431 = vmatpush.msra.mxu0 %v1430
    %v1432 = vand.u32 %v825, 4294901760
    %v1433 = vsub.f32 %v825, %v1432
    %v1434 = vand.u32 %v1433, 4294901760
    %1435 = vmatpush.msra.mxu0 %v1434
    %v1436 = vand.u32 %v824, 4294901760
    %v1437 = vsub.f32 %v824, %v1436
    %v1438 = vand.u32 %v1437, 4294901760
    %1439 = vmatpush.msra.mxu0 %v1438
    %v1440 = vand.u32 %v823, 4294901760
    %v1441 = vsub.f32 %v823, %v1440
    %v1442 = vand.u32 %v1441, 4294901760
    %1443 = vmatpush.msra.mxu0 %v1442
    %v1444 = vand.u32 %v822, 4294901760
    %v1445 = vsub.f32 %v822, %v1444
    %v1446 = vand.u32 %v1445, 4294901760
    %1447 = vmatpush.msra.mxu0 %v1446
    %v1448 = vand.u32 %v821, 4294901760
    %v1449 = vsub.f32 %v821, %v1448
    %v1450 = vand.u32 %v1449, 4294901760
    %1451 = vmatpush.msra.mxu0 %v1450
    %v1452 = vand.u32 %v820, 4294901760
    %v1453 = vsub.f32 %v820, %v1452
    %v1454 = vand.u32 %v1453, 4294901760
    %1455 = vmatpush.msra.mxu0 %v1454
    %v1456 = vand.u32 %v819, 4294901760
    %v1457 = vsub.f32 %v819, %v1456
    %v1458 = vand.u32 %v1457, 4294901760
    %1459 = vmatpush.msra.mxu0 %v1458
    %v1460 = vand.u32 %v818, 4294901760
    %v1461 = vsub.f32 %v818, %v1460
    %v1462 = vand.u32 %v1461, 4294901760
    %1463 = vmatpush.msra.mxu0 %v1462
    %v1464 = vand.u32 %v817, 4294901760
    %v1465 = vsub.f32 %v817, %v1464
    %v1466 = vand.u32 %v1465, 4294901760
    %1467 = vmatpush.msra.mxu0 %v1466
    %v1468 = vand.u32 %v816, 4294901760
    %v1469 = vsub.f32 %v816, %v1468
    %v1470 = vand.u32 %v1469, 4294901760
    %1471 = vmatpush.msra.mxu0 %v1470
    %v1472 = vand.u32 %v115, 4294901760
    %1473 = vmatmul.f32.gmra.mxu0 %v1472
    %v1474 = vpop.f32.mrf.mxu0
    %v1475 = vadd.f32 %v1406, %v1474
    %1476 = vdwg.mxu0
    %v1477 = vand.u32 %v831, 4294901760
    %1478 = vmatpush.msra.mxu0 %v1477
    %v1479 = vand.u32 %v830, 4294901760
    %1480 = vmatpush.msra.mxu0 %v1479
    %v1481 = vand.u32 %v829, 4294901760
    %1482 = vmatpush.msra.mxu0 %v1481
    %v1483 = vand.u32 %v828, 4294901760
    %1484 = vmatpush.msra.mxu0 %v1483
    %v1485 = vand.u32 %v827, 4294901760
    %1486 = vmatpush.msra.mxu0 %v1485
    %v1487 = vand.u32 %v826, 4294901760
    %1488 = vmatpush.msra.mxu0 %v1487
    %v1489 = vand.u32 %v825, 4294901760
    %1490 = vmatpush.msra.mxu0 %v1489
    %v1491 = vand.u32 %v824, 4294901760
    %1492 = vmatpush.msra.mxu0 %v1491
    %v1493 = vand.u32 %v823, 4294901760
    %1494 = vmatpush.msra.mxu0 %v1493
    %v1495 = vand.u32 %v822, 4294901760
    %1496 = vmatpush.msra.mxu0 %v1495
    %v1497 = vand.u32 %v821, 4294901760
    %1498 = vmatpush.msra.mxu0 %v1497
    %v1499 = vand.u32 %v820, 4294901760
    %1500 = vmatpush.msra.mxu0 %v1499
    %v1501 = vand.u32 %v819, 4294901760
    %1502 = vmatpush.msra.mxu0 %v1501
    %v1503 = vand.u32 %v818, 4294901760
    %1504 = vmatpush.msra.mxu0 %v1503
    %v1505 = vand.u32 %v817, 4294901760
    %1506 = vmatpush.msra.mxu0 %v1505
    %v1507 = vand.u32 %v816, 4294901760
    %1508 = vmatpush.msra.mxu0 %v1507
    %v1509 = vand.u32 %v115, 4294901760
    %1510 = vmatmul.f32.gmra.mxu0 %v1509
    %v1511 = vpop.f32.mrf.mxu0
    %v1512 = vadd.f32 %v1475, %v1511
    %1513 = vdwg.mxu0
    %v1514 = vstv %s76
    %v1515 = vmul.f32 %v1514, %v798
    %v1516 = vstv %s77
    %v1517 = vmul.f32 %v1516, %v1512
    %v1518 = vadd.f32 %v1515, %v1517
    %v1519 = vstv %s78
    %v1520 = vadd.f32 %v1518, %v1519
    %v1521 = vmul.f32 %v798, %v1512
    %v1522 = vstv %s79
    %v1523 = vmul.f32 %v1522, %v1521
    %v1524 = vadd.f32 %v1520, %v1523
    %1525 = vst [vmem:[#allocation10] sm:$0x1] %v1524
    // Predicated region
    $region34: #{tpu_custom_call.1} parent=1 // pred_check
      _
    $region35: #{tpu_custom_call.1} parent=1 // pred_check_branch
      %1527 = sbr.rel (0) target = $region37
    $region36: #{tpu_custom_call.1} parent=1 // pred_region
      %1529 = vsyncadd [#allocation4], 0
      %s1531 = sshll.u32 [#allocation10], 4
      %s1532 = int_to_ptr.vmem [resolvable:$true] %s1531
      %s1533 = sshll.u32 %s4, 4
      %s1534 = int_to_ptr.hbm [resolvable:$true] %s1533
      %1536 = dma.vmem_to_hbm [thread:$0]  %s1532, 16, %s1534, [#allocation4]
    $region37: #{tpu_custom_call.1} parent=1 // pred_fallthru
      _
    // Predicated region
    $region38: #{tpu_custom_call.1} parent=1 // pred_check
      _
    $region39: #{tpu_custom_call.1} parent=1 // pred_check_branch
      %1538 = sbr.rel (0) target = $region41
    $region40: #{tpu_custom_call.1} parent=1 // pred_region
      %1540 = dma.done [#allocation4], 16
    $region41: #{tpu_custom_call.1} parent=1 // pred_fallthru
      _
    %1541 = vsyncpa [#allocation3], 1
    %1542 = vsyncpa [#allocation8], 1
    %1543 = vsyncpa [#allocation4], 1
    %1544 = vsyncpa [#allocation5], 1

</llo_original>
